<compile_context>
chip_gen: v7x
topology: tpu7x:2x2x1
jax: 0.10.0
libtpu: 0.0.40
codegen_flags: <defaults>
</compile_context>

<pallas_src>
import functools

import jax
import jax.numpy as jnp
from jax.experimental import pallas as pl


# ----------------------------------------------------------------------------
# Fused kernel: LSTM recurrence (PyTorch gate order [i, f, g, o]) + MLP head.
# ----------------------------------------------------------------------------
def _siamese_kernel(x_ref, wih_ref, whh_ref, b_ref,
                    w1_ref, b1_ref, w2_ref, b2_ref, w3_ref, b3_ref,
                    out_ref, *, seq_len, batch_pair):
    T = seq_len
    N = batch_pair                 # 2 * B (both siamese branches stacked)
    GW = whh_ref.shape[0]          # lane-aligned per-gate width (>= H, mult of 128)

    # --- (1) Hoisted input projection for all T steps: one big-M matmul. ---
    # x_ref: (T*N, D), time-major rows.  xproj: (T*N, 4*GW).
    xproj = (jnp.dot(x_ref[...], wih_ref[...],
                     preferred_element_type=jnp.float32)
             + b_ref[...])

    # --- (2) Sequential recurrence, fully unrolled (T is small & static). ---
    # Only h @ W_hh sits on the time-dependency chain.
    h = jnp.zeros((N, GW), jnp.float32)
    c = jnp.zeros((N, GW), jnp.float32)
    for t in range(T):
        gates = xproj[t * N:(t + 1) * N, :] + jnp.dot(
            h, whh_ref[...], preferred_element_type=jnp.float32)  # (N, 4*GW)
        # Lane-aligned (128-wide) gate slices; padded lanes stay exactly zero.
        i_g = jax.nn.sigmoid(gates[:, 0 * GW:1 * GW])
        f_g = jax.nn.sigmoid(gates[:, 1 * GW:2 * GW])
        g_g = jnp.tanh(gates[:, 2 * GW:3 * GW])
        o_g = jax.nn.sigmoid(gates[:, 3 * GW:4 * GW])
        c = f_g * c + i_g * g_g
        h = o_g * jnp.tanh(c)

    # --- (3) Fused MLP head on the final hidden state (kept in VMEM). ---
    a1 = jnp.maximum(
        jnp.dot(h, w1_ref[...], preferred_element_type=jnp.float32)
        + b1_ref[...], 0.0)                                   # (N, 128)
    a2 = jnp.maximum(
        jnp.dot(a1, w2_ref[...], preferred_element_type=jnp.float32)
        + b2_ref[...], 0.0)                                   # (N, 64)
    B = N // 2
    dist = jnp.abs(a2[:B, :] - a2[B:, :])                     # (B, 64)
    logit = (jnp.dot(dist, w3_ref[...], preferred_element_type=jnp.float32)
             + b3_ref[...])                                   # (B, 1)
    out_ref[...] = jax.nn.sigmoid(logit).astype(out_ref.dtype)


# ----------------------------------------------------------------------------
# Wrapper: restructure input, launch the single fused pallas_call.
# ----------------------------------------------------------------------------
@jax.jit
def siamese_lstm_forward(x, kp):
    # x: (B, 2, T, D) float32 (batch_first, two siamese branches).
    B, _, T, D = x.shape
    N = 2 * B
    xs = jnp.concatenate([x[:, 0], x[:, 1]], axis=0)          # (2B, T, D)
    xs = jnp.transpose(xs, (1, 0, 2)).reshape(T * N, D)       # time-major rows

    kernel = functools.partial(_siamese_kernel, seq_len=T, batch_pair=N)
    return pl.pallas_call(
        kernel,
        out_shape=jax.ShapeDtypeStruct((B, 1), jnp.float32),
    )(xs, kp["wih"], kp["whh"], kp["b"],
      kp["w1"], kp["b1"], kp["w2"], kp["b2"], kp["w3"], kp["b3"])


# ----------------------------------------------------------------------------
# Parameter packing: PyTorch-layout weights -> lane-aligned kernel layout.
# ----------------------------------------------------------------------------
def pack_params(raw):
    w_ih, w_hh = raw["w_ih"], raw["w_hh"]          # (4H, D), (4H, H)
    bias = raw["bias"]                             # (4H,) = b_ih + b_hh
    fourH, D = w_ih.shape
    H = fourH // 4
    GW = ((H + 127) // 128) * 128                  # pad each gate to 128 lanes

    wih_p = jnp.zeros((D, 4 * GW), jnp.float32)
    whh_p = jnp.zeros((GW, 4 * GW), jnp.float32)
    b_p = jnp.zeros((1, 4 * GW), jnp.float32)
    for k in range(4):                             # gate order [i, f, g, o]
        wih_p = wih_p.at[:, k * GW:k * GW + H].set(w_ih[k * H:(k + 1) * H, :].T)
        whh_p = whh_p.at[:H, k * GW:k * GW + H].set(w_hh[k * H:(k + 1) * H, :].T)
        b_p = b_p.at[0, k * GW:k * GW + H].set(bias[k * H:(k + 1) * H])

    # fc1 weight padded with zero rows so padded h-lanes contribute nothing.
    w1_p = jnp.zeros((GW, raw["w1"].shape[1]), jnp.float32).at[:H, :].set(raw["w1"])
    return {
        "wih": wih_p, "whh": whh_p, "b": b_p,
        "w1": w1_p, "b1": raw["b1"].reshape(1, -1),
        "w2": raw["w2"], "b2": raw["b2"].reshape(1, -1),
        "w3": raw["w3"], "b3": raw["b3"].reshape(1, -1),
    }


def init_raw_params(key, input_dim, hidden_dim):
    keys = jax.random.split(key, 10)
    H, D = hidden_dim, input_dim
    s = 0.1
    w_ih = jax.random.normal(keys[0], (4 * H, D), jnp.float32) * s
    w_hh = jax.random.normal(keys[1], (4 * H, H), jnp.float32) * s
    b_ih = jax.random.normal(keys[2], (4 * H,), jnp.float32) * s
    b_hh = jax.random.normal(keys[3], (4 * H,), jnp.float32) * s
    return {
        "w_ih": w_ih, "w_hh": w_hh, "bias": b_ih + b_hh,
        "w1": jax.random.normal(keys[4], (H, 128), jnp.float32) * s,
        "b1": jax.random.normal(keys[5], (128,), jnp.float32) * s,
        "w2": jax.random.normal(keys[6], (128, 64), jnp.float32) * s,
        "b2": jax.random.normal(keys[7], (64,), jnp.float32) * s,
        "w3": jax.random.normal(keys[8], (64, 1), jnp.float32) * s,
        "b3": jax.random.normal(keys[9], (1,), jnp.float32) * s,
    }


# ----------------------------------------------------------------------------
# Pure-JAX reference (unpadded weights) for correctness checking.
# ----------------------------------------------------------------------------
def _lstm_ref(xs_ntd, w_ih, w_hh, bias):
    H = w_hh.shape[1]
    N = xs_ntd.shape[0]
    xs_t = jnp.transpose(xs_ntd, (1, 0, 2))       # (T, N, D)

    def step(carry, x_t):
        h, c = carry
        gates = x_t @ w_ih.T + h @ w_hh.T + bias
        i, f, g, o = jnp.split(gates, 4, axis=-1)
        i, f, o = jax.nn.sigmoid(i), jax.nn.sigmoid(f), jax.nn.sigmoid(o)
        g = jnp.tanh(g)
        c = f * c + i * g
        h = o * jnp.tanh(c)
        return (h, c), None

    init = (jnp.zeros((N, H), jnp.float32), jnp.zeros((N, H), jnp.float32))
    (h, _), _ = jax.lax.scan(step, init, xs_t)
    return h


def _forward_ref(x, raw):
    B = x.shape[0]
    xs = jnp.concatenate([x[:, 0], x[:, 1]], axis=0)
    h = _lstm_ref(xs, raw["w_ih"], raw["w_hh"], raw["bias"])

    def branch(h_):
        a1 = jax.nn.relu(h_ @ raw["w1"] + raw["b1"])
        return jax.nn.relu(a1 @ raw["w2"] + raw["b2"])

    o1, o2 = branch(h[:B]), branch(h[B:])
    dist = jnp.abs(o1 - o2)
    return jax.nn.sigmoid(dist @ raw["w3"] + raw["b3"])


if __name__ == "__main__":
    B, T, D, H = 2, 8, 16, 32
    key = jax.random.PRNGKey(0)
    k_x, k_p = jax.random.split(key)
    x = jax.random.normal(k_x, (B, 2, T, D), jnp.float32)

    raw = init_raw_params(k_p, D, H)
    kp = pack_params(raw)

    out = jax.block_until_ready(siamese_lstm_forward(x, kp))
    ref = _forward_ref(x, raw)

    assert out.shape == (B, 1), out.shape
    assert jnp.allclose(out, ref, rtol=1e-4, atol=1e-5), (out, ref)

    print("KERNEL_OK")
</pallas_src>

<mosaic_0001>
module attributes {stable_mosaic.version = 11 : i64} {
  func.func @_siamese_kernel(%arg0: memref<32x16xf32, #tpu.memory_space<vmem>>, %arg1: memref<16x512xf32, #tpu.memory_space<vmem>>, %arg2: memref<128x512xf32, #tpu.memory_space<vmem>>, %arg3: memref<1x512xf32, #tpu.memory_space<vmem>>, %arg4: memref<128x128xf32, #tpu.memory_space<vmem>>, %arg5: memref<1x128xf32, #tpu.memory_space<vmem>>, %arg6: memref<128x64xf32, #tpu.memory_space<vmem>>, %arg7: memref<1x64xf32, #tpu.memory_space<vmem>>, %arg8: memref<64x1xf32, #tpu.memory_space<vmem>>, %arg9: memref<1x1xf32, #tpu.memory_space<vmem>>, %arg10: memref<2x1xf32, #tpu.memory_space<vmem>>) attributes {dimension_semantics = [], scalar_prefetch = 0 : i64, scratch_operands = 0 : i64, tpu.core_type = #tpu.core_type<tc>} {
    %c0 = arith.constant 0 : index
    %c0_0 = arith.constant 0 : index
    %0 = vector.load %arg0[%c0, %c0_0] : memref<32x16xf32, #tpu.memory_space<vmem>>, vector<32x16xf32>
    %c0_1 = arith.constant 0 : index
    %c0_2 = arith.constant 0 : index
    %1 = vector.load %arg1[%c0_1, %c0_2] : memref<16x512xf32, #tpu.memory_space<vmem>>, vector<16x512xf32>
    %cst = arith.constant dense<0.000000e+00> : vector<32x512xf32>
    %2 = tpu.matmul %0, %1, %cst {dimension_numbers = #tpu.dot_dimension_numbers<[1], [0], [0], [1], [0, 0, 1, 1], [], []>} : vector<32x16xf32>, vector<16x512xf32>, vector<32x512xf32> -> vector<32x512xf32>
    %c0_3 = arith.constant 0 : index
    %c0_4 = arith.constant 0 : index
    %3 = vector.load %arg3[%c0_3, %c0_4] : memref<1x512xf32, #tpu.memory_space<vmem>>, vector<1x512xf32>
    %4 = vector.broadcast %3 : vector<1x512xf32> to vector<32x512xf32>
    %5 = arith.addf %2, %4 : vector<32x512xf32>
    %cst_5 = arith.constant 0.000000e+00 : f32
    %6 = vector.broadcast %cst_5 : f32 to vector<4x128xf32>
    %cst_6 = arith.constant 0.000000e+00 : f32
    %7 = vector.broadcast %cst_6 : f32 to vector<4x128xf32>
    %8 = vector.extract_strided_slice %5 {offsets = [0, 0], sizes = [4, 512], strides = [1, 1]} : vector<32x512xf32> to vector<4x512xf32>
    %c0_7 = arith.constant 0 : index
    %c0_8 = arith.constant 0 : index
    %9 = vector.load %arg2[%c0_7, %c0_8] : memref<128x512xf32, #tpu.memory_space<vmem>>, vector<128x512xf32>
    %cst_9 = arith.constant dense<0.000000e+00> : vector<4x512xf32>
    %10 = tpu.matmul %6, %9, %cst_9 {dimension_numbers = #tpu.dot_dimension_numbers<[1], [0], [0], [1], [0, 0, 1, 1], [], []>} : vector<4x128xf32>, vector<128x512xf32>, vector<4x512xf32> -> vector<4x512xf32>
    %11 = arith.addf %8, %10 : vector<4x512xf32>
    %12 = vector.extract_strided_slice %11 {offsets = [0, 0], sizes = [4, 128], strides = [1, 1]} : vector<4x512xf32> to vector<4x128xf32>
    %13 = arith.negf %12 : vector<4x128xf32>
    %14 = math.exp %13 : vector<4x128xf32>
    %cst_10 = arith.constant 1.000000e+00 : f32
    %15 = vector.broadcast %cst_10 : f32 to vector<4x128xf32>
    %16 = arith.addf %15, %14 : vector<4x128xf32>
    %17 = arith.divf %15, %16 : vector<4x128xf32>
    %18 = vector.extract_strided_slice %11 {offsets = [0, 128], sizes = [4, 128], strides = [1, 1]} : vector<4x512xf32> to vector<4x128xf32>
    %19 = arith.negf %18 : vector<4x128xf32>
    %20 = math.exp %19 : vector<4x128xf32>
    %cst_11 = arith.constant 1.000000e+00 : f32
    %21 = vector.broadcast %cst_11 : f32 to vector<4x128xf32>
    %22 = arith.addf %21, %20 : vector<4x128xf32>
    %23 = arith.divf %21, %22 : vector<4x128xf32>
    %24 = vector.extract_strided_slice %11 {offsets = [0, 256], sizes = [4, 128], strides = [1, 1]} : vector<4x512xf32> to vector<4x128xf32>
    %25 = math.tanh %24 : vector<4x128xf32>
    %26 = vector.extract_strided_slice %11 {offsets = [0, 384], sizes = [4, 128], strides = [1, 1]} : vector<4x512xf32> to vector<4x128xf32>
    %27 = arith.negf %26 : vector<4x128xf32>
    %28 = math.exp %27 : vector<4x128xf32>
    %cst_12 = arith.constant 1.000000e+00 : f32
    %29 = vector.broadcast %cst_12 : f32 to vector<4x128xf32>
    %30 = arith.addf %29, %28 : vector<4x128xf32>
    %31 = arith.divf %29, %30 : vector<4x128xf32>
    %32 = arith.mulf %23, %7 : vector<4x128xf32>
    %33 = arith.mulf %17, %25 : vector<4x128xf32>
    %34 = arith.addf %32, %33 : vector<4x128xf32>
    %35 = math.tanh %34 : vector<4x128xf32>
    %36 = arith.mulf %31, %35 : vector<4x128xf32>
    %37 = vector.extract_strided_slice %5 {offsets = [4, 0], sizes = [4, 512], strides = [1, 1]} : vector<32x512xf32> to vector<4x512xf32>
    %c0_13 = arith.constant 0 : index
    %c0_14 = arith.constant 0 : index
    %38 = vector.load %arg2[%c0_13, %c0_14] : memref<128x512xf32, #tpu.memory_space<vmem>>, vector<128x512xf32>
    %cst_15 = arith.constant dense<0.000000e+00> : vector<4x512xf32>
    %39 = tpu.matmul %36, %38, %cst_15 {dimension_numbers = #tpu.dot_dimension_numbers<[1], [0], [0], [1], [0, 0, 1, 1], [], []>} : vector<4x128xf32>, vector<128x512xf32>, vector<4x512xf32> -> vector<4x512xf32>
    %40 = arith.addf %37, %39 : vector<4x512xf32>
    %41 = vector.extract_strided_slice %40 {offsets = [0, 0], sizes = [4, 128], strides = [1, 1]} : vector<4x512xf32> to vector<4x128xf32>
    %42 = arith.negf %41 : vector<4x128xf32>
    %43 = math.exp %42 : vector<4x128xf32>
    %cst_16 = arith.constant 1.000000e+00 : f32
    %44 = vector.broadcast %cst_16 : f32 to vector<4x128xf32>
    %45 = arith.addf %44, %43 : vector<4x128xf32>
    %46 = arith.divf %44, %45 : vector<4x128xf32>
    %47 = vector.extract_strided_slice %40 {offsets = [0, 128], sizes = [4, 128], strides = [1, 1]} : vector<4x512xf32> to vector<4x128xf32>
    %48 = arith.negf %47 : vector<4x128xf32>
    %49 = math.exp %48 : vector<4x128xf32>
    %cst_17 = arith.constant 1.000000e+00 : f32
    %50 = vector.broadcast %cst_17 : f32 to vector<4x128xf32>
    %51 = arith.addf %50, %49 : vector<4x128xf32>
    %52 = arith.divf %50, %51 : vector<4x128xf32>
    %53 = vector.extract_strided_slice %40 {offsets = [0, 256], sizes = [4, 128], strides = [1, 1]} : vector<4x512xf32> to vector<4x128xf32>
    %54 = math.tanh %53 : vector<4x128xf32>
    %55 = vector.extract_strided_slice %40 {offsets = [0, 384], sizes = [4, 128], strides = [1, 1]} : vector<4x512xf32> to vector<4x128xf32>
    %56 = arith.negf %55 : vector<4x128xf32>
    %57 = math.exp %56 : vector<4x128xf32>
    %cst_18 = arith.constant 1.000000e+00 : f32
    %58 = vector.broadcast %cst_18 : f32 to vector<4x128xf32>
    %59 = arith.addf %58, %57 : vector<4x128xf32>
    %60 = arith.divf %58, %59 : vector<4x128xf32>
    %61 = arith.mulf %52, %34 : vector<4x128xf32>
    %62 = arith.mulf %46, %54 : vector<4x128xf32>
    %63 = arith.addf %61, %62 : vector<4x128xf32>
    %64 = math.tanh %63 : vector<4x128xf32>
    %65 = arith.mulf %60, %64 : vector<4x128xf32>
    %66 = vector.extract_strided_slice %5 {offsets = [8, 0], sizes = [4, 512], strides = [1, 1]} : vector<32x512xf32> to vector<4x512xf32>
    %c0_19 = arith.constant 0 : index
    %c0_20 = arith.constant 0 : index
    %67 = vector.load %arg2[%c0_19, %c0_20] : memref<128x512xf32, #tpu.memory_space<vmem>>, vector<128x512xf32>
    %cst_21 = arith.constant dense<0.000000e+00> : vector<4x512xf32>
    %68 = tpu.matmul %65, %67, %cst_21 {dimension_numbers = #tpu.dot_dimension_numbers<[1], [0], [0], [1], [0, 0, 1, 1], [], []>} : vector<4x128xf32>, vector<128x512xf32>, vector<4x512xf32> -> vector<4x512xf32>
    %69 = arith.addf %66, %68 : vector<4x512xf32>
    %70 = vector.extract_strided_slice %69 {offsets = [0, 0], sizes = [4, 128], strides = [1, 1]} : vector<4x512xf32> to vector<4x128xf32>
    %71 = arith.negf %70 : vector<4x128xf32>
    %72 = math.exp %71 : vector<4x128xf32>
    %cst_22 = arith.constant 1.000000e+00 : f32
    %73 = vector.broadcast %cst_22 : f32 to vector<4x128xf32>
    %74 = arith.addf %73, %72 : vector<4x128xf32>
    %75 = arith.divf %73, %74 : vector<4x128xf32>
    %76 = vector.extract_strided_slice %69 {offsets = [0, 128], sizes = [4, 128], strides = [1, 1]} : vector<4x512xf32> to vector<4x128xf32>
    %77 = arith.negf %76 : vector<4x128xf32>
    %78 = math.exp %77 : vector<4x128xf32>
    %cst_23 = arith.constant 1.000000e+00 : f32
    %79 = vector.broadcast %cst_23 : f32 to vector<4x128xf32>
    %80 = arith.addf %79, %78 : vector<4x128xf32>
    %81 = arith.divf %79, %80 : vector<4x128xf32>
    %82 = vector.extract_strided_slice %69 {offsets = [0, 256], sizes = [4, 128], strides = [1, 1]} : vector<4x512xf32> to vector<4x128xf32>
    %83 = math.tanh %82 : vector<4x128xf32>
    %84 = vector.extract_strided_slice %69 {offsets = [0, 384], sizes = [4, 128], strides = [1, 1]} : vector<4x512xf32> to vector<4x128xf32>
    %85 = arith.negf %84 : vector<4x128xf32>
    %86 = math.exp %85 : vector<4x128xf32>
    %cst_24 = arith.constant 1.000000e+00 : f32
    %87 = vector.broadcast %cst_24 : f32 to vector<4x128xf32>
    %88 = arith.addf %87, %86 : vector<4x128xf32>
    %89 = arith.divf %87, %88 : vector<4x128xf32>
    %90 = arith.mulf %81, %63 : vector<4x128xf32>
    %91 = arith.mulf %75, %83 : vector<4x128xf32>
    %92 = arith.addf %90, %91 : vector<4x128xf32>
    %93 = math.tanh %92 : vector<4x128xf32>
    %94 = arith.mulf %89, %93 : vector<4x128xf32>
    %95 = vector.extract_strided_slice %5 {offsets = [12, 0], sizes = [4, 512], strides = [1, 1]} : vector<32x512xf32> to vector<4x512xf32>
    %c0_25 = arith.constant 0 : index
    %c0_26 = arith.constant 0 : index
    %96 = vector.load %arg2[%c0_25, %c0_26] : memref<128x512xf32, #tpu.memory_space<vmem>>, vector<128x512xf32>
    %cst_27 = arith.constant dense<0.000000e+00> : vector<4x512xf32>
    %97 = tpu.matmul %94, %96, %cst_27 {dimension_numbers = #tpu.dot_dimension_numbers<[1], [0], [0], [1], [0, 0, 1, 1], [], []>} : vector<4x128xf32>, vector<128x512xf32>, vector<4x512xf32> -> vector<4x512xf32>
    %98 = arith.addf %95, %97 : vector<4x512xf32>
    %99 = vector.extract_strided_slice %98 {offsets = [0, 0], sizes = [4, 128], strides = [1, 1]} : vector<4x512xf32> to vector<4x128xf32>
    %100 = arith.negf %99 : vector<4x128xf32>
    %101 = math.exp %100 : vector<4x128xf32>
    %cst_28 = arith.constant 1.000000e+00 : f32
    %102 = vector.broadcast %cst_28 : f32 to vector<4x128xf32>
    %103 = arith.addf %102, %101 : vector<4x128xf32>
    %104 = arith.divf %102, %103 : vector<4x128xf32>
    %105 = vector.extract_strided_slice %98 {offsets = [0, 128], sizes = [4, 128], strides = [1, 1]} : vector<4x512xf32> to vector<4x128xf32>
    %106 = arith.negf %105 : vector<4x128xf32>
    %107 = math.exp %106 : vector<4x128xf32>
    %cst_29 = arith.constant 1.000000e+00 : f32
    %108 = vector.broadcast %cst_29 : f32 to vector<4x128xf32>
    %109 = arith.addf %108, %107 : vector<4x128xf32>
    %110 = arith.divf %108, %109 : vector<4x128xf32>
    %111 = vector.extract_strided_slice %98 {offsets = [0, 256], sizes = [4, 128], strides = [1, 1]} : vector<4x512xf32> to vector<4x128xf32>
    %112 = math.tanh %111 : vector<4x128xf32>
    %113 = vector.extract_strided_slice %98 {offsets = [0, 384], sizes = [4, 128], strides = [1, 1]} : vector<4x512xf32> to vector<4x128xf32>
    %114 = arith.negf %113 : vector<4x128xf32>
    %115 = math.exp %114 : vector<4x128xf32>
    %cst_30 = arith.constant 1.000000e+00 : f32
    %116 = vector.broadcast %cst_30 : f32 to vector<4x128xf32>
    %117 = arith.addf %116, %115 : vector<4x128xf32>
    %118 = arith.divf %116, %117 : vector<4x128xf32>
    %119 = arith.mulf %110, %92 : vector<4x128xf32>
    %120 = arith.mulf %104, %112 : vector<4x128xf32>
    %121 = arith.addf %119, %120 : vector<4x128xf32>
    %122 = math.tanh %121 : vector<4x128xf32>
    %123 = arith.mulf %118, %122 : vector<4x128xf32>
    %124 = vector.extract_strided_slice %5 {offsets = [16, 0], sizes = [4, 512], strides = [1, 1]} : vector<32x512xf32> to vector<4x512xf32>
    %c0_31 = arith.constant 0 : index
    %c0_32 = arith.constant 0 : index
    %125 = vector.load %arg2[%c0_31, %c0_32] : memref<128x512xf32, #tpu.memory_space<vmem>>, vector<128x512xf32>
    %cst_33 = arith.constant dense<0.000000e+00> : vector<4x512xf32>
    %126 = tpu.matmul %123, %125, %cst_33 {dimension_numbers = #tpu.dot_dimension_numbers<[1], [0], [0], [1], [0, 0, 1, 1], [], []>} : vector<4x128xf32>, vector<128x512xf32>, vector<4x512xf32> -> vector<4x512xf32>
    %127 = arith.addf %124, %126 : vector<4x512xf32>
    %128 = vector.extract_strided_slice %127 {offsets = [0, 0], sizes = [4, 128], strides = [1, 1]} : vector<4x512xf32> to vector<4x128xf32>
    %129 = arith.negf %128 : vector<4x128xf32>
    %130 = math.exp %129 : vector<4x128xf32>
    %cst_34 = arith.constant 1.000000e+00 : f32
    %131 = vector.broadcast %cst_34 : f32 to vector<4x128xf32>
    %132 = arith.addf %131, %130 : vector<4x128xf32>
    %133 = arith.divf %131, %132 : vector<4x128xf32>
    %134 = vector.extract_strided_slice %127 {offsets = [0, 128], sizes = [4, 128], strides = [1, 1]} : vector<4x512xf32> to vector<4x128xf32>
    %135 = arith.negf %134 : vector<4x128xf32>
    %136 = math.exp %135 : vector<4x128xf32>
    %cst_35 = arith.constant 1.000000e+00 : f32
    %137 = vector.broadcast %cst_35 : f32 to vector<4x128xf32>
    %138 = arith.addf %137, %136 : vector<4x128xf32>
    %139 = arith.divf %137, %138 : vector<4x128xf32>
    %140 = vector.extract_strided_slice %127 {offsets = [0, 256], sizes = [4, 128], strides = [1, 1]} : vector<4x512xf32> to vector<4x128xf32>
    %141 = math.tanh %140 : vector<4x128xf32>
    %142 = vector.extract_strided_slice %127 {offsets = [0, 384], sizes = [4, 128], strides = [1, 1]} : vector<4x512xf32> to vector<4x128xf32>
    %143 = arith.negf %142 : vector<4x128xf32>
    %144 = math.exp %143 : vector<4x128xf32>
    %cst_36 = arith.constant 1.000000e+00 : f32
    %145 = vector.broadcast %cst_36 : f32 to vector<4x128xf32>
    %146 = arith.addf %145, %144 : vector<4x128xf32>
    %147 = arith.divf %145, %146 : vector<4x128xf32>
    %148 = arith.mulf %139, %121 : vector<4x128xf32>
    %149 = arith.mulf %133, %141 : vector<4x128xf32>
    %150 = arith.addf %148, %149 : vector<4x128xf32>
    %151 = math.tanh %150 : vector<4x128xf32>
    %152 = arith.mulf %147, %151 : vector<4x128xf32>
    %153 = vector.extract_strided_slice %5 {offsets = [20, 0], sizes = [4, 512], strides = [1, 1]} : vector<32x512xf32> to vector<4x512xf32>
    %c0_37 = arith.constant 0 : index
    %c0_38 = arith.constant 0 : index
    %154 = vector.load %arg2[%c0_37, %c0_38] : memref<128x512xf32, #tpu.memory_space<vmem>>, vector<128x512xf32>
    %cst_39 = arith.constant dense<0.000000e+00> : vector<4x512xf32>
    %155 = tpu.matmul %152, %154, %cst_39 {dimension_numbers = #tpu.dot_dimension_numbers<[1], [0], [0], [1], [0, 0, 1, 1], [], []>} : vector<4x128xf32>, vector<128x512xf32>, vector<4x512xf32> -> vector<4x512xf32>
    %156 = arith.addf %153, %155 : vector<4x512xf32>
    %157 = vector.extract_strided_slice %156 {offsets = [0, 0], sizes = [4, 128], strides = [1, 1]} : vector<4x512xf32> to vector<4x128xf32>
    %158 = arith.negf %157 : vector<4x128xf32>
    %159 = math.exp %158 : vector<4x128xf32>
    %cst_40 = arith.constant 1.000000e+00 : f32
    %160 = vector.broadcast %cst_40 : f32 to vector<4x128xf32>
    %161 = arith.addf %160, %159 : vector<4x128xf32>
    %162 = arith.divf %160, %161 : vector<4x128xf32>
    %163 = vector.extract_strided_slice %156 {offsets = [0, 128], sizes = [4, 128], strides = [1, 1]} : vector<4x512xf32> to vector<4x128xf32>
    %164 = arith.negf %163 : vector<4x128xf32>
    %165 = math.exp %164 : vector<4x128xf32>
    %cst_41 = arith.constant 1.000000e+00 : f32
    %166 = vector.broadcast %cst_41 : f32 to vector<4x128xf32>
    %167 = arith.addf %166, %165 : vector<4x128xf32>
    %168 = arith.divf %166, %167 : vector<4x128xf32>
    %169 = vector.extract_strided_slice %156 {offsets = [0, 256], sizes = [4, 128], strides = [1, 1]} : vector<4x512xf32> to vector<4x128xf32>
    %170 = math.tanh %169 : vector<4x128xf32>
    %171 = vector.extract_strided_slice %156 {offsets = [0, 384], sizes = [4, 128], strides = [1, 1]} : vector<4x512xf32> to vector<4x128xf32>
    %172 = arith.negf %171 : vector<4x128xf32>
    %173 = math.exp %172 : vector<4x128xf32>
    %cst_42 = arith.constant 1.000000e+00 : f32
    %174 = vector.broadcast %cst_42 : f32 to vector<4x128xf32>
    %175 = arith.addf %174, %173 : vector<4x128xf32>
    %176 = arith.divf %174, %175 : vector<4x128xf32>
    %177 = arith.mulf %168, %150 : vector<4x128xf32>
    %178 = arith.mulf %162, %170 : vector<4x128xf32>
    %179 = arith.addf %177, %178 : vector<4x128xf32>
    %180 = math.tanh %179 : vector<4x128xf32>
    %181 = arith.mulf %176, %180 : vector<4x128xf32>
    %182 = vector.extract_strided_slice %5 {offsets = [24, 0], sizes = [4, 512], strides = [1, 1]} : vector<32x512xf32> to vector<4x512xf32>
    %c0_43 = arith.constant 0 : index
    %c0_44 = arith.constant 0 : index
    %183 = vector.load %arg2[%c0_43, %c0_44] : memref<128x512xf32, #tpu.memory_space<vmem>>, vector<128x512xf32>
    %cst_45 = arith.constant dense<0.000000e+00> : vector<4x512xf32>
    %184 = tpu.matmul %181, %183, %cst_45 {dimension_numbers = #tpu.dot_dimension_numbers<[1], [0], [0], [1], [0, 0, 1, 1], [], []>} : vector<4x128xf32>, vector<128x512xf32>, vector<4x512xf32> -> vector<4x512xf32>
    %185 = arith.addf %182, %184 : vector<4x512xf32>
    %186 = vector.extract_strided_slice %185 {offsets = [0, 0], sizes = [4, 128], strides = [1, 1]} : vector<4x512xf32> to vector<4x128xf32>
    %187 = arith.negf %186 : vector<4x128xf32>
    %188 = math.exp %187 : vector<4x128xf32>
    %cst_46 = arith.constant 1.000000e+00 : f32
    %189 = vector.broadcast %cst_46 : f32 to vector<4x128xf32>
    %190 = arith.addf %189, %188 : vector<4x128xf32>
    %191 = arith.divf %189, %190 : vector<4x128xf32>
    %192 = vector.extract_strided_slice %185 {offsets = [0, 128], sizes = [4, 128], strides = [1, 1]} : vector<4x512xf32> to vector<4x128xf32>
    %193 = arith.negf %192 : vector<4x128xf32>
    %194 = math.exp %193 : vector<4x128xf32>
    %cst_47 = arith.constant 1.000000e+00 : f32
    %195 = vector.broadcast %cst_47 : f32 to vector<4x128xf32>
    %196 = arith.addf %195, %194 : vector<4x128xf32>
    %197 = arith.divf %195, %196 : vector<4x128xf32>
    %198 = vector.extract_strided_slice %185 {offsets = [0, 256], sizes = [4, 128], strides = [1, 1]} : vector<4x512xf32> to vector<4x128xf32>
    %199 = math.tanh %198 : vector<4x128xf32>
    %200 = vector.extract_strided_slice %185 {offsets = [0, 384], sizes = [4, 128], strides = [1, 1]} : vector<4x512xf32> to vector<4x128xf32>
    %201 = arith.negf %200 : vector<4x128xf32>
    %202 = math.exp %201 : vector<4x128xf32>
    %cst_48 = arith.constant 1.000000e+00 : f32
    %203 = vector.broadcast %cst_48 : f32 to vector<4x128xf32>
    %204 = arith.addf %203, %202 : vector<4x128xf32>
    %205 = arith.divf %203, %204 : vector<4x128xf32>
    %206 = arith.mulf %197, %179 : vector<4x128xf32>
    %207 = arith.mulf %191, %199 : vector<4x128xf32>
    %208 = arith.addf %206, %207 : vector<4x128xf32>
    %209 = math.tanh %208 : vector<4x128xf32>
    %210 = arith.mulf %205, %209 : vector<4x128xf32>
    %211 = vector.extract_strided_slice %5 {offsets = [28, 0], sizes = [4, 512], strides = [1, 1]} : vector<32x512xf32> to vector<4x512xf32>
    %c0_49 = arith.constant 0 : index
    %c0_50 = arith.constant 0 : index
    %212 = vector.load %arg2[%c0_49, %c0_50] : memref<128x512xf32, #tpu.memory_space<vmem>>, vector<128x512xf32>
    %cst_51 = arith.constant dense<0.000000e+00> : vector<4x512xf32>
    %213 = tpu.matmul %210, %212, %cst_51 {dimension_numbers = #tpu.dot_dimension_numbers<[1], [0], [0], [1], [0, 0, 1, 1], [], []>} : vector<4x128xf32>, vector<128x512xf32>, vector<4x512xf32> -> vector<4x512xf32>
    %214 = arith.addf %211, %213 : vector<4x512xf32>
    %215 = vector.extract_strided_slice %214 {offsets = [0, 0], sizes = [4, 128], strides = [1, 1]} : vector<4x512xf32> to vector<4x128xf32>
    %216 = arith.negf %215 : vector<4x128xf32>
    %217 = math.exp %216 : vector<4x128xf32>
    %cst_52 = arith.constant 1.000000e+00 : f32
    %218 = vector.broadcast %cst_52 : f32 to vector<4x128xf32>
    %219 = arith.addf %218, %217 : vector<4x128xf32>
    %220 = arith.divf %218, %219 : vector<4x128xf32>
    %221 = vector.extract_strided_slice %214 {offsets = [0, 128], sizes = [4, 128], strides = [1, 1]} : vector<4x512xf32> to vector<4x128xf32>
    %222 = arith.negf %221 : vector<4x128xf32>
    %223 = math.exp %222 : vector<4x128xf32>
    %cst_53 = arith.constant 1.000000e+00 : f32
    %224 = vector.broadcast %cst_53 : f32 to vector<4x128xf32>
    %225 = arith.addf %224, %223 : vector<4x128xf32>
    %226 = arith.divf %224, %225 : vector<4x128xf32>
    %227 = vector.extract_strided_slice %214 {offsets = [0, 256], sizes = [4, 128], strides = [1, 1]} : vector<4x512xf32> to vector<4x128xf32>
    %228 = math.tanh %227 : vector<4x128xf32>
    %229 = vector.extract_strided_slice %214 {offsets = [0, 384], sizes = [4, 128], strides = [1, 1]} : vector<4x512xf32> to vector<4x128xf32>
    %230 = arith.negf %229 : vector<4x128xf32>
    %231 = math.exp %230 : vector<4x128xf32>
    %cst_54 = arith.constant 1.000000e+00 : f32
    %232 = vector.broadcast %cst_54 : f32 to vector<4x128xf32>
    %233 = arith.addf %232, %231 : vector<4x128xf32>
    %234 = arith.divf %232, %233 : vector<4x128xf32>
    %235 = arith.mulf %226, %208 : vector<4x128xf32>
    %236 = arith.mulf %220, %228 : vector<4x128xf32>
    %237 = arith.addf %235, %236 : vector<4x128xf32>
    %238 = math.tanh %237 : vector<4x128xf32>
    %239 = arith.mulf %234, %238 : vector<4x128xf32>
    %c0_55 = arith.constant 0 : index
    %c0_56 = arith.constant 0 : index
    %240 = vector.load %arg4[%c0_55, %c0_56] : memref<128x128xf32, #tpu.memory_space<vmem>>, vector<128x128xf32>
    %cst_57 = arith.constant dense<0.000000e+00> : vector<4x128xf32>
    %241 = tpu.matmul %239, %240, %cst_57 {dimension_numbers = #tpu.dot_dimension_numbers<[1], [0], [0], [1], [0, 0, 1, 1], [], []>} : vector<4x128xf32>, vector<128x128xf32>, vector<4x128xf32> -> vector<4x128xf32>
    %c0_58 = arith.constant 0 : index
    %c0_59 = arith.constant 0 : index
    %242 = vector.load %arg5[%c0_58, %c0_59] : memref<1x128xf32, #tpu.memory_space<vmem>>, vector<1x128xf32>
    %243 = vector.broadcast %242 : vector<1x128xf32> to vector<4x128xf32>
    %244 = arith.addf %241, %243 : vector<4x128xf32>
    %cst_60 = arith.constant 0.000000e+00 : f32
    %245 = vector.broadcast %cst_60 : f32 to vector<4x128xf32>
    %246 = arith.maximumf %244, %245 : vector<4x128xf32>
    %c0_61 = arith.constant 0 : index
    %c0_62 = arith.constant 0 : index
    %247 = vector.load %arg6[%c0_61, %c0_62] : memref<128x64xf32, #tpu.memory_space<vmem>>, vector<128x64xf32>
    %cst_63 = arith.constant dense<0.000000e+00> : vector<4x64xf32>
    %248 = tpu.matmul %246, %247, %cst_63 {dimension_numbers = #tpu.dot_dimension_numbers<[1], [0], [0], [1], [0, 0, 1, 1], [], []>} : vector<4x128xf32>, vector<128x64xf32>, vector<4x64xf32> -> vector<4x64xf32>
    %c0_64 = arith.constant 0 : index
    %c0_65 = arith.constant 0 : index
    %249 = vector.load %arg7[%c0_64, %c0_65] : memref<1x64xf32, #tpu.memory_space<vmem>>, vector<1x64xf32>
    %250 = vector.broadcast %249 : vector<1x64xf32> to vector<4x64xf32>
    %251 = arith.addf %248, %250 : vector<4x64xf32>
    %cst_66 = arith.constant 0.000000e+00 : f32
    %252 = vector.broadcast %cst_66 : f32 to vector<4x64xf32>
    %253 = arith.maximumf %251, %252 : vector<4x64xf32>
    %254 = vector.extract_strided_slice %253 {offsets = [0, 0], sizes = [2, 64], strides = [1, 1]} : vector<4x64xf32> to vector<2x64xf32>
    %255 = vector.extract_strided_slice %253 {offsets = [2, 0], sizes = [2, 64], strides = [1, 1]} : vector<4x64xf32> to vector<2x64xf32>
    %256 = arith.subf %254, %255 : vector<2x64xf32>
    %257 = math.absf %256 : vector<2x64xf32>
    %c0_67 = arith.constant 0 : index
    %c0_68 = arith.constant 0 : index
    %258 = vector.load %arg8[%c0_67, %c0_68] : memref<64x1xf32, #tpu.memory_space<vmem>>, vector<64x1xf32>
    %cst_69 = arith.constant dense<0.000000e+00> : vector<2x1xf32>
    %259 = tpu.matmul %257, %258, %cst_69 {dimension_numbers = #tpu.dot_dimension_numbers<[1], [0], [0], [1], [0, 0, 1, 1], [], []>} : vector<2x64xf32>, vector<64x1xf32>, vector<2x1xf32> -> vector<2x1xf32>
    %c0_70 = arith.constant 0 : index
    %c0_71 = arith.constant 0 : index
    %260 = vector.load %arg9[%c0_70, %c0_71] : memref<1x1xf32, #tpu.memory_space<vmem>>, vector<1x1xf32>
    %261 = vector.broadcast %260 : vector<1x1xf32> to vector<2x1xf32>
    %262 = arith.addf %259, %261 : vector<2x1xf32>
    %263 = arith.negf %262 : vector<2x1xf32>
    %264 = math.exp %263 : vector<2x1xf32>
    %cst_72 = arith.constant 1.000000e+00 : f32
    %265 = vector.broadcast %cst_72 : f32 to vector<2x1xf32>
    %266 = arith.addf %265, %264 : vector<2x1xf32>
    %267 = arith.divf %265, %266 : vector<2x1xf32>
    %c0_73 = arith.constant 0 : index
    %c0_74 = arith.constant 0 : index
    %268 = vector.load %arg10[%c0_73, %c0_74] : memref<2x1xf32, #tpu.memory_space<vmem>>, vector<2x1xf32>
    tpu.vector_store %arg10[%c0_73, %c0_74], %267 {strides = array<i32>} : memref<2x1xf32, #tpu.memory_space<vmem>>, vector<2x1xf32>,
    return
  }
}

</mosaic_0001>

<llo_original>
// kernel: siamese_lstm_forward.1
$region0: #{siamese_lstm_forward.1}
  #allocation0 [shape = 'u32[]', space=smem, size = 0x4, offset = 0x4, fixed_abs, tag = 'smem constant byte address 0x4 - core index']
  #allocation1 [shape = 'u32[144,128]{1,0:T(1,128)}', space=vmem, size = 0x12000, scoped, tag = 'internal scratch']
  #allocation2 [shape = 'f32[1,1]{1,0:T(1,128)S(1)}', space=vmem, size = 0x200, scoped, tag = 'scoped memory for siamese_lstm_forward.1']
  %s0 = inlined_call_operand.vmem [shape: f32[32,16], index: 0, kind: input, shape index: {}]
  %s1 = inlined_call_operand.vmem [shape: f32[16,512], index: 1, kind: input, shape index: {}]
  %s2 = inlined_call_operand.hbm [shape: f32[128,512], index: 2, kind: input, shape index: {}]
  %s3 = inlined_call_operand.vmem [shape: f32[1,512], index: 3, kind: input, shape index: {}]
  %s4 = inlined_call_operand.vmem [shape: f32[128,128], index: 4, kind: input, shape index: {}]
  %s5 = inlined_call_operand.vmem [shape: f32[1,128], index: 5, kind: input, shape index: {}]
  %s6 = inlined_call_operand.vmem [shape: f32[128,64], index: 6, kind: input, shape index: {}]
  %s7 = inlined_call_operand.vmem [shape: f32[1,64], index: 7, kind: input, shape index: {}]
  %s8 = inlined_call_operand.vmem [shape: f32[64,1], index: 8, kind: input, shape index: {}]
  %s9 = inlined_call_operand.<no memory space> [shape: f32[1,1], index: 9, kind: input, shape index: {}]
  %s10 = inlined_call_operand.vmem [shape: f32[2,1], index: 10, kind: output, shape index: {}]
  %s11 = sld [smem:[#allocation0]]
  $region54: #{siamese_lstm_forward.1} parent=0
    _
  %s13 = ssub.s32 1, %s11
  %s14 = scalar_select 0, %s13, %s11
  %v15 = vstv %s9
  %16 = vst [vmem:[#allocation2] sm:$0x1] %v15
  $region1: #{siamese_lstm_forward.1} parent=0
    #allocation3 [shape = 'u8[262144]{0}', space=vmem, size = 0x40000, scoped, tag = 'input window, operand 2, single buffered']
    #allocation4 [shape = 's32[1]{0}', space=sflag, size = 0x4, scoped, tag = 'scoped memory for siamese_lstm_forward.1']
    %17 = vsyncpa [#allocation4], 0
    // Predicated region
    $region2: #{siamese_lstm_forward.1} parent=1 // pred_check
      _
    $region3: #{siamese_lstm_forward.1} parent=1 // pred_check_branch
      %19 = sbr.rel (0) target = $region5
    $region4: #{siamese_lstm_forward.1} parent=1 // pred_region
      _
    $region5: #{siamese_lstm_forward.1} parent=1 // pred_fallthru
      _
    // Predicated region
    $region6: #{siamese_lstm_forward.1} parent=1 // pred_check
      _
    $region7: #{siamese_lstm_forward.1} parent=1 // pred_check_branch
      %21 = sbr.rel (0) target = $region9
    $region8: #{siamese_lstm_forward.1} parent=1 // pred_region
      _
    $region9: #{siamese_lstm_forward.1} parent=1 // pred_fallthru
      _
    // Predicated region
    $region10: #{siamese_lstm_forward.1} parent=1 // pred_check
      _
    $region11: #{siamese_lstm_forward.1} parent=1 // pred_check_branch
      %23 = sbr.rel (0) target = $region13
    $region12: #{siamese_lstm_forward.1} parent=1 // pred_region
      %s25 = ssub.s32 8192, 8192
      %26 = vsyncadd [#allocation4], %s25
      %s27 = sshll.u32 [#allocation3], 4
      %s28 = int_to_ptr.vmem [resolvable:$true] %s27
      %33 = dma.hbm_to_vmem [thread:$0]  %s2, 8192, %s28, [#allocation4], 512, 512, 32
    $region13: #{siamese_lstm_forward.1} parent=1 // pred_fallthru
      _
    // Predicated region
    $region14: #{siamese_lstm_forward.1} parent=1 // pred_check
      _
    $region15: #{siamese_lstm_forward.1} parent=1 // pred_check_branch
      %35 = sbr.rel (0) target = $region17
    $region16: #{siamese_lstm_forward.1} parent=1 // pred_region
      _
    $region17: #{siamese_lstm_forward.1} parent=1 // pred_fallthru
      _
    // Predicated region
    $region18: #{siamese_lstm_forward.1} parent=1 // pred_check
      _
    $region19: #{siamese_lstm_forward.1} parent=1 // pred_check_branch
      %37 = sbr.rel (0) target = $region21
    $region20: #{siamese_lstm_forward.1} parent=1 // pred_region
      _
    $region21: #{siamese_lstm_forward.1} parent=1 // pred_fallthru
      _
    // Predicated region
    $region22: #{siamese_lstm_forward.1} parent=1 // pred_check
      _
    $region23: #{siamese_lstm_forward.1} parent=1 // pred_check_branch
      %39 = sbr.rel (0) target = $region25
    $region24: #{siamese_lstm_forward.1} parent=1 // pred_region
      _
    $region25: #{siamese_lstm_forward.1} parent=1 // pred_fallthru
      _
    // Predicated region
    $region26: #{siamese_lstm_forward.1} parent=1 // pred_check
      _
    $region27: #{siamese_lstm_forward.1} parent=1 // pred_check_branch
      %41 = sbr.rel (0) target = $region29
    $region28: #{siamese_lstm_forward.1} parent=1 // pred_region
      _
    $region29: #{siamese_lstm_forward.1} parent=1 // pred_fallthru
      _
    // Predicated region
    $region30: #{siamese_lstm_forward.1} parent=1 // pred_check
      _
    $region31: #{siamese_lstm_forward.1} parent=1 // pred_check_branch
      %43 = sbr.rel (0) target = $region33
    $region32: #{siamese_lstm_forward.1} parent=1 // pred_region
      _
    $region33: #{siamese_lstm_forward.1} parent=1 // pred_fallthru
      _
    // Predicated region
    $region34: #{siamese_lstm_forward.1} parent=1 // pred_check
      _
    $region35: #{siamese_lstm_forward.1} parent=1 // pred_check_branch
      %45 = sbr.rel (0) target = $region37
    $region36: #{siamese_lstm_forward.1} parent=1 // pred_region
      _
    $region37: #{siamese_lstm_forward.1} parent=1 // pred_fallthru
      _
    // Predicated region
    $region38: #{siamese_lstm_forward.1} parent=1 // pred_check
      _
    $region39: #{siamese_lstm_forward.1} parent=1 // pred_check_branch
      %47 = sbr.rel (0) target = $region41
    $region40: #{siamese_lstm_forward.1} parent=1 // pred_region
      _
    $region41: #{siamese_lstm_forward.1} parent=1 // pred_fallthru
      _
    // Predicated region
    $region42: #{siamese_lstm_forward.1} parent=1 // pred_check
      _
    $region43: #{siamese_lstm_forward.1} parent=1 // pred_check_branch
      %49 = sbr.rel (0) target = $region45
    $region44: #{siamese_lstm_forward.1} parent=1 // pred_region
      %50 = dma.done [#allocation4], 8192
    $region45: #{siamese_lstm_forward.1} parent=1 // pred_fallthru
      _
    %v51 = vld [vmem:[%s0] sm:$0xff]
    %v52 = vld [vmem:[%s0 + $0x8] sm:$0xff]
    %v53 = vld [vmem:[%s0 + $0x10] sm:$0xff]
    %v54 = vld [vmem:[%s0 + $0x18] sm:$0xff]
    %v55 = vld [vmem:[%s1] sm:$0xff]
    %v56 = vld [vmem:[%s1 + $0x8] sm:$0xff]
    %v57 = vld [vmem:[%s1 + $0x10] sm:$0xff]
    %v58 = vld [vmem:[%s1 + $0x18] sm:$0xff]
    %v59 = vld [vmem:[%s1 + $0x20] sm:$0xff]
    %v60 = vld [vmem:[%s1 + $0x28] sm:$0xff]
    %v61 = vld [vmem:[%s1 + $0x30] sm:$0xff]
    %v62 = vld [vmem:[%s1 + $0x38] sm:$0xff]
    %v63 = vld [vmem:[%s3] sm:$0xf]
    %v65 = vlaneseq
    %v66 = vshrl.u32 %v65, 7
    %v67 = vsub.s32 0, %v66
    %v68 = vrot.slane %v63, %v67
    %v69 = vlaneseq
    %v70 = vshrl.u32 %v69, 7
    %v71 = vsub.s32 1, %v70
    %v72 = vrot.slane %v63, %v71
    %v73 = vlaneseq
    %v74 = vshrl.u32 %v73, 7
    %v75 = vsub.s32 2, %v74
    %v76 = vrot.slane %v63, %v75
    %v77 = vlaneseq
    %v78 = vshrl.u32 %v77, 7
    %v79 = vsub.s32 3, %v78
    %v80 = vrot.slane %v63, %v79
    %vm85 = vcmask 130048
    %v87 = vsel %vm85, %v51, 0
    %v90 = vsel %vm85, %v52, 0
    %v93 = vsel %vm85, %v53, 0
    %v96 = vsel %vm85, %v54, 0
    %98 = vmatprep.subr.mxu0 %v56
    %99 = vmatpush1.msra.mxu0 %v55
    %100 = vmatprep.subr.mxu0 %v60
    %101 = vmatpush1.msra.mxu0 %v59
    %102 = vmatprep.subr.mxu0 0.0
    %103 = vmatpush1.msra.mxu0 0.0
    %104 = vmatprep.subr.mxu0 0.0
    %105 = vmatpush1.msra.mxu0 0.0
    %106 = vmatprep.subr.mxu0 0.0
    %107 = vmatpush1.msra.mxu0 0.0
    %108 = vmatprep.subr.mxu0 0.0
    %109 = vmatpush1.msra.mxu0 0.0
    %110 = vmatprep.subr.mxu0 0.0
    %111 = vmatpush1.msra.mxu0 0.0
    %112 = vmatprep.subr.mxu0 0.0
    %113 = vmatpush1.msra.mxu0 0.0
    %114 = vmatprep.subr.mxu0 0.0
    %115 = vmatpush1.msra.mxu0 0.0
    %116 = vmatprep.subr.mxu0 0.0
    %117 = vmatpush1.msra.mxu0 0.0
    %118 = vmatprep.subr.mxu0 0.0
    %119 = vmatpush1.msra.mxu0 0.0
    %120 = vmatprep.subr.mxu0 0.0
    %121 = vmatpush1.msra.mxu0 0.0
    %122 = vmatprep.subr.mxu0 0.0
    %123 = vmatpush1.msra.mxu0 0.0
    %124 = vmatprep.subr.mxu0 0.0
    %125 = vmatpush1.msra.mxu0 0.0
    %126 = vmatprep.subr.mxu0 0.0
    %127 = vmatpush1.msra.mxu0 0.0
    %128 = vmatprep.subr.mxu0 0.0
    %129 = vmatpush1.msra.mxu0 0.0
    %130 = vmatprep.subr.mxu0 0.0
    %131 = vmatpush1.msra.mxu0 0.0
    %132 = vmatprep.subr.mxu0 0.0
    %133 = vmatpush1.msra.mxu0 0.0
    %134 = vmatprep.subr.mxu0 0.0
    %135 = vmatpush1.msra.mxu0 0.0
    %136 = vmatprep.subr.mxu0 0.0
    %137 = vmatpush1.msra.mxu0 0.0
    %138 = vmatprep.subr.mxu0 0.0
    %139 = vmatpush1.msra.mxu0 0.0
    %140 = vmatprep.subr.mxu0 0.0
    %141 = vmatpush1.msra.mxu0 0.0
    %142 = vmatprep.subr.mxu0 0.0
    %143 = vmatpush1.msra.mxu0 0.0
    %144 = vmatprep.subr.mxu0 0.0
    %145 = vmatpush1.msra.mxu0 0.0
    %146 = vmatprep.subr.mxu0 0.0
    %147 = vmatpush1.msra.mxu0 0.0
    %148 = vmatprep.subr.mxu0 0.0
    %149 = vmatpush1.msra.mxu0 0.0
    %150 = vmatprep.subr.mxu0 0.0
    %151 = vmatpush1.msra.mxu0 0.0
    %152 = vmatprep.subr.mxu0 0.0
    %153 = vmatpush1.msra.mxu0 0.0
    %154 = vmatprep.subr.mxu0 0.0
    %155 = vmatpush1.msra.mxu0 0.0
    %156 = vmatprep.subr.mxu0 0.0
    %157 = vmatpush1.msra.mxu0 0.0
    %158 = vmatprep.subr.mxu0 0.0
    %159 = vmatpush1.msra.mxu0 0.0
    %160 = vmatprep.subr.mxu0 0.0
    %161 = vmatpush1.msra.mxu0 0.0
    %162 = vmatprep.mubr.f32.mxu0 0.0
    %163 = vmatmul.mubr.f32.gmra.mrb[0].mxu0 %v87
    %v164 = vpop.f32.mrb[0].mxu0
    %v165 = vadd.f32 %v68, %v164
    %v166 = vpop.f32.mrb[0].mxu0
    %v167 = vadd.f32 %v72, %v166
    %168 = vmatprep.mubr.f32.mxu0 0.0
    %169 = vmatmul.mubr.f32.gmra.mrb[0].mxu0 %v90
    %v170 = vpop.f32.mrb[0].mxu0
    %v171 = vadd.f32 %v68, %v170
    %v172 = vpop.f32.mrb[0].mxu0
    %v173 = vadd.f32 %v72, %v172
    %174 = vmatprep.mubr.f32.mxu0 0.0
    %175 = vmatmul.mubr.f32.gmra.mrb[0].mxu0 %v93
    %v176 = vpop.f32.mrb[0].mxu0
    %v177 = vadd.f32 %v68, %v176
    %v178 = vpop.f32.mrb[0].mxu0
    %v179 = vadd.f32 %v72, %v178
    %180 = vmatprep.mubr.f32.mxu0 0.0
    %181 = vmatmul.mubr.f32.gmra.mrb[0].mxu0 %v96
    %v182 = vpop.f32.mrb[0].mxu0
    %v183 = vadd.f32 %v68, %v182
    %v184 = vpop.f32.mrb[0].mxu0
    %v185 = vadd.f32 %v72, %v184
    %186 = vdwg.mxu0
    %187 = vmatprep.subr.mxu0 %v58
    %188 = vmatpush1.msra.mxu0 %v57
    %189 = vmatprep.subr.mxu0 %v62
    %190 = vmatpush1.msra.mxu0 %v61
    %191 = vmatprep.subr.mxu0 0.0
    %192 = vmatpush1.msra.mxu0 0.0
    %193 = vmatprep.subr.mxu0 0.0
    %194 = vmatpush1.msra.mxu0 0.0
    %195 = vmatprep.subr.mxu0 0.0
    %196 = vmatpush1.msra.mxu0 0.0
    %197 = vmatprep.subr.mxu0 0.0
    %198 = vmatpush1.msra.mxu0 0.0
    %199 = vmatprep.subr.mxu0 0.0
    %200 = vmatpush1.msra.mxu0 0.0
    %201 = vmatprep.subr.mxu0 0.0
    %202 = vmatpush1.msra.mxu0 0.0
    %203 = vmatprep.subr.mxu0 0.0
    %204 = vmatpush1.msra.mxu0 0.0
    %205 = vmatprep.subr.mxu0 0.0
    %206 = vmatpush1.msra.mxu0 0.0
    %207 = vmatprep.subr.mxu0 0.0
    %208 = vmatpush1.msra.mxu0 0.0
    %209 = vmatprep.subr.mxu0 0.0
    %210 = vmatpush1.msra.mxu0 0.0
    %211 = vmatprep.subr.mxu0 0.0
    %212 = vmatpush1.msra.mxu0 0.0
    %213 = vmatprep.subr.mxu0 0.0
    %214 = vmatpush1.msra.mxu0 0.0
    %215 = vmatprep.subr.mxu0 0.0
    %216 = vmatpush1.msra.mxu0 0.0
    %217 = vmatprep.subr.mxu0 0.0
    %218 = vmatpush1.msra.mxu0 0.0
    %219 = vmatprep.subr.mxu0 0.0
    %220 = vmatpush1.msra.mxu0 0.0
    %221 = vmatprep.subr.mxu0 0.0
    %222 = vmatpush1.msra.mxu0 0.0
    %223 = vmatprep.subr.mxu0 0.0
    %224 = vmatpush1.msra.mxu0 0.0
    %225 = vmatprep.subr.mxu0 0.0
    %226 = vmatpush1.msra.mxu0 0.0
    %227 = vmatprep.subr.mxu0 0.0
    %228 = vmatpush1.msra.mxu0 0.0
    %229 = vmatprep.subr.mxu0 0.0
    %230 = vmatpush1.msra.mxu0 0.0
    %231 = vmatprep.subr.mxu0 0.0
    %232 = vmatpush1.msra.mxu0 0.0
    %233 = vmatprep.subr.mxu0 0.0
    %234 = vmatpush1.msra.mxu0 0.0
    %235 = vmatprep.subr.mxu0 0.0
    %236 = vmatpush1.msra.mxu0 0.0
    %237 = vmatprep.subr.mxu0 0.0
    %238 = vmatpush1.msra.mxu0 0.0
    %239 = vmatprep.subr.mxu0 0.0
    %240 = vmatpush1.msra.mxu0 0.0
    %241 = vmatprep.subr.mxu0 0.0
    %242 = vmatpush1.msra.mxu0 0.0
    %243 = vmatprep.subr.mxu0 0.0
    %244 = vmatpush1.msra.mxu0 0.0
    %245 = vmatprep.subr.mxu0 0.0
    %246 = vmatpush1.msra.mxu0 0.0
    %247 = vmatprep.subr.mxu0 0.0
    %248 = vmatpush1.msra.mxu0 0.0
    %249 = vmatprep.subr.mxu0 0.0
    %250 = vmatpush1.msra.mxu0 0.0
    %251 = vmatprep.mubr.f32.mxu0 0.0
    %252 = vmatmul.mubr.f32.gmra.mrb[0].mxu0 %v87
    %v253 = vpop.f32.mrb[0].mxu0
    %v254 = vadd.f32 %v76, %v253
    %v255 = vpop.f32.mrb[0].mxu0
    %v256 = vadd.f32 %v80, %v255
    %257 = vmatprep.mubr.f32.mxu0 0.0
    %258 = vmatmul.mubr.f32.gmra.mrb[0].mxu0 %v90
    %v259 = vpop.f32.mrb[0].mxu0
    %v260 = vadd.f32 %v76, %v259
    %v261 = vpop.f32.mrb[0].mxu0
    %v262 = vadd.f32 %v80, %v261
    %263 = vmatprep.mubr.f32.mxu0 0.0
    %264 = vmatmul.mubr.f32.gmra.mrb[0].mxu0 %v93
    %v265 = vpop.f32.mrb[0].mxu0
    %v266 = vadd.f32 %v76, %v265
    %v267 = vpop.f32.mrb[0].mxu0
    %v268 = vadd.f32 %v80, %v267
    %269 = vmatprep.mubr.f32.mxu0 0.0
    %270 = vmatmul.mubr.f32.gmra.mrb[0].mxu0 %v96
    %v271 = vpop.f32.mrb[0].mxu0
    %v272 = vadd.f32 %v76, %v271
    %v273 = vpop.f32.mrb[0].mxu0
    %v274 = vadd.f32 %v80, %v273
    %275 = vdwg.mxu0
    %v276 = vld [vmem:[#allocation3] sm:$0xff]
    %v277 = vld [vmem:[#allocation3 + $0x8] sm:$0xff]
    %v278 = vld [vmem:[#allocation3 + $0x10] sm:$0xff]
    %v279 = vld [vmem:[#allocation3 + $0x18] sm:$0xff]
    %v280 = vld [vmem:[#allocation3 + $0x20] sm:$0xff]
    %v281 = vld [vmem:[#allocation3 + $0x28] sm:$0xff]
    %v282 = vld [vmem:[#allocation3 + $0x30] sm:$0xff]
    %v283 = vld [vmem:[#allocation3 + $0x38] sm:$0xff]
    %v284 = vld [vmem:[#allocation3 + $0x40] sm:$0xff]
    %v285 = vld [vmem:[#allocation3 + $0x48] sm:$0xff]
    %v286 = vld [vmem:[#allocation3 + $0x50] sm:$0xff]
    %v287 = vld [vmem:[#allocation3 + $0x58] sm:$0xff]
    %v288 = vld [vmem:[#allocation3 + $0x60] sm:$0xff]
    %v289 = vld [vmem:[#allocation3 + $0x68] sm:$0xff]
    %v290 = vld [vmem:[#allocation3 + $0x70] sm:$0xff]
    %v291 = vld [vmem:[#allocation3 + $0x78] sm:$0xff]
    %v292 = vld [vmem:[#allocation3 + $0x80] sm:$0xff]
    %v293 = vld [vmem:[#allocation3 + $0x88] sm:$0xff]
    %v294 = vld [vmem:[#allocation3 + $0x90] sm:$0xff]
    %v295 = vld [vmem:[#allocation3 + $0x98] sm:$0xff]
    %v296 = vld [vmem:[#allocation3 + $0xa0] sm:$0xff]
    %v297 = vld [vmem:[#allocation3 + $0xa8] sm:$0xff]
    %v298 = vld [vmem:[#allocation3 + $0xb0] sm:$0xff]
    %v299 = vld [vmem:[#allocation3 + $0xb8] sm:$0xff]
    %v300 = vld [vmem:[#allocation3 + $0xc0] sm:$0xff]
    %v301 = vld [vmem:[#allocation3 + $0xc8] sm:$0xff]
    %v302 = vld [vmem:[#allocation3 + $0xd0] sm:$0xff]
    %v303 = vld [vmem:[#allocation3 + $0xd8] sm:$0xff]
    %v304 = vld [vmem:[#allocation3 + $0xe0] sm:$0xff]
    %v305 = vld [vmem:[#allocation3 + $0xe8] sm:$0xff]
    %v306 = vld [vmem:[#allocation3 + $0xf0] sm:$0xff]
    %v307 = vld [vmem:[#allocation3 + $0xf8] sm:$0xff]
    %v308 = vld [vmem:[#allocation3 + $0x100] sm:$0xff]
    %v309 = vld [vmem:[#allocation3 + $0x108] sm:$0xff]
    %v310 = vld [vmem:[#allocation3 + $0x110] sm:$0xff]
    %v311 = vld [vmem:[#allocation3 + $0x118] sm:$0xff]
    %v312 = vld [vmem:[#allocation3 + $0x120] sm:$0xff]
    %v313 = vld [vmem:[#allocation3 + $0x128] sm:$0xff]
    %v314 = vld [vmem:[#allocation3 + $0x130] sm:$0xff]
    %v315 = vld [vmem:[#allocation3 + $0x138] sm:$0xff]
    %v316 = vld [vmem:[#allocation3 + $0x140] sm:$0xff]
    %v317 = vld [vmem:[#allocation3 + $0x148] sm:$0xff]
    %v318 = vld [vmem:[#allocation3 + $0x150] sm:$0xff]
    %v319 = vld [vmem:[#allocation3 + $0x158] sm:$0xff]
    %v320 = vld [vmem:[#allocation3 + $0x160] sm:$0xff]
    %v321 = vld [vmem:[#allocation3 + $0x168] sm:$0xff]
    %v322 = vld [vmem:[#allocation3 + $0x170] sm:$0xff]
    %v323 = vld [vmem:[#allocation3 + $0x178] sm:$0xff]
    %v324 = vld [vmem:[#allocation3 + $0x180] sm:$0xff]
    %v325 = vld [vmem:[#allocation3 + $0x188] sm:$0xff]
    %v326 = vld [vmem:[#allocation3 + $0x190] sm:$0xff]
    %v327 = vld [vmem:[#allocation3 + $0x198] sm:$0xff]
    %v328 = vld [vmem:[#allocation3 + $0x1a0] sm:$0xff]
    %v329 = vld [vmem:[#allocation3 + $0x1a8] sm:$0xff]
    %v330 = vld [vmem:[#allocation3 + $0x1b0] sm:$0xff]
    %v331 = vld [vmem:[#allocation3 + $0x1b8] sm:$0xff]
    %v332 = vld [vmem:[#allocation3 + $0x1c0] sm:$0xff]
    %v333 = vld [vmem:[#allocation3 + $0x1c8] sm:$0xff]
    %v334 = vld [vmem:[#allocation3 + $0x1d0] sm:$0xff]
    %v335 = vld [vmem:[#allocation3 + $0x1d8] sm:$0xff]
    %v336 = vld [vmem:[#allocation3 + $0x1e0] sm:$0xff]
    %v337 = vld [vmem:[#allocation3 + $0x1e8] sm:$0xff]
    %v338 = vld [vmem:[#allocation3 + $0x1f0] sm:$0xff]
    %v339 = vld [vmem:[#allocation3 + $0x1f8] sm:$0xff]
    %340 = vmatprep.subr.mxu0 %v277
    %341 = vmatpush1.msra.mxu0 %v276
    %342 = vmatprep.subr.mxu0 %v281
    %343 = vmatpush1.msra.mxu0 %v280
    %344 = vmatprep.subr.mxu0 %v285
    %345 = vmatpush1.msra.mxu0 %v284
    %346 = vmatprep.subr.mxu0 %v289
    %347 = vmatpush1.msra.mxu0 %v288
    %348 = vmatprep.subr.mxu0 %v293
    %349 = vmatpush1.msra.mxu0 %v292
    %350 = vmatprep.subr.mxu0 %v297
    %351 = vmatpush1.msra.mxu0 %v296
    %352 = vmatprep.subr.mxu0 %v301
    %353 = vmatpush1.msra.mxu0 %v300
    %354 = vmatprep.subr.mxu0 %v305
    %355 = vmatpush1.msra.mxu0 %v304
    %356 = vmatprep.subr.mxu0 %v309
    %357 = vmatpush1.msra.mxu0 %v308
    %358 = vmatprep.subr.mxu0 %v313
    %359 = vmatpush1.msra.mxu0 %v312
    %360 = vmatprep.subr.mxu0 %v317
    %361 = vmatpush1.msra.mxu0 %v316
    %362 = vmatprep.subr.mxu0 %v321
    %363 = vmatpush1.msra.mxu0 %v320
    %364 = vmatprep.subr.mxu0 %v325
    %365 = vmatpush1.msra.mxu0 %v324
    %366 = vmatprep.subr.mxu0 %v329
    %367 = vmatpush1.msra.mxu0 %v328
    %368 = vmatprep.subr.mxu0 %v333
    %369 = vmatpush1.msra.mxu0 %v332
    %370 = vmatprep.subr.mxu0 %v337
    %371 = vmatpush1.msra.mxu0 %v336
    %372 = vmatprep.subr.mxu0 0.0
    %373 = vmatpush1.msra.mxu0 0.0
    %374 = vmatprep.subr.mxu0 0.0
    %375 = vmatpush1.msra.mxu0 0.0
    %376 = vmatprep.subr.mxu0 0.0
    %377 = vmatpush1.msra.mxu0 0.0
    %378 = vmatprep.subr.mxu0 0.0
    %379 = vmatpush1.msra.mxu0 0.0
    %380 = vmatprep.subr.mxu0 0.0
    %381 = vmatpush1.msra.mxu0 0.0
    %382 = vmatprep.subr.mxu0 0.0
    %383 = vmatpush1.msra.mxu0 0.0
    %384 = vmatprep.subr.mxu0 0.0
    %385 = vmatpush1.msra.mxu0 0.0
    %386 = vmatprep.subr.mxu0 0.0
    %387 = vmatpush1.msra.mxu0 0.0
    %388 = vmatprep.subr.mxu0 0.0
    %389 = vmatpush1.msra.mxu0 0.0
    %390 = vmatprep.subr.mxu0 0.0
    %391 = vmatpush1.msra.mxu0 0.0
    %392 = vmatprep.subr.mxu0 0.0
    %393 = vmatpush1.msra.mxu0 0.0
    %394 = vmatprep.subr.mxu0 0.0
    %395 = vmatpush1.msra.mxu0 0.0
    %396 = vmatprep.subr.mxu0 0.0
    %397 = vmatpush1.msra.mxu0 0.0
    %398 = vmatprep.subr.mxu0 0.0
    %399 = vmatpush1.msra.mxu0 0.0
    %400 = vmatprep.subr.mxu0 0.0
    %401 = vmatpush1.msra.mxu0 0.0
    %402 = vmatprep.subr.mxu0 0.0
    %403 = vmatpush1.msra.mxu0 0.0
    %404 = vmatprep.mubr.f32.mxu0 0.0
    %405 = vmatmul.mubr.f32.gmra.mrb[0].mxu0 0.0
    %v406 = vpop.f32.mrb[0].mxu0
    %v407 = vadd.f32 0.0, %v406
    %v408 = vpop.f32.mrb[0].mxu0
    %v409 = vadd.f32 0.0, %v408
    %410 = vdwg.mxu0
    %411 = vmatprep.subr.mxu0 %v279
    %412 = vmatpush1.msra.mxu0 %v278
    %413 = vmatprep.subr.mxu0 %v283
    %414 = vmatpush1.msra.mxu0 %v282
    %415 = vmatprep.subr.mxu0 %v287
    %416 = vmatpush1.msra.mxu0 %v286
    %417 = vmatprep.subr.mxu0 %v291
    %418 = vmatpush1.msra.mxu0 %v290
    %419 = vmatprep.subr.mxu0 %v295
    %420 = vmatpush1.msra.mxu0 %v294
    %421 = vmatprep.subr.mxu0 %v299
    %422 = vmatpush1.msra.mxu0 %v298
    %423 = vmatprep.subr.mxu0 %v303
    %424 = vmatpush1.msra.mxu0 %v302
    %425 = vmatprep.subr.mxu0 %v307
    %426 = vmatpush1.msra.mxu0 %v306
    %427 = vmatprep.subr.mxu0 %v311
    %428 = vmatpush1.msra.mxu0 %v310
    %429 = vmatprep.subr.mxu0 %v315
    %430 = vmatpush1.msra.mxu0 %v314
    %431 = vmatprep.subr.mxu0 %v319
    %432 = vmatpush1.msra.mxu0 %v318
    %433 = vmatprep.subr.mxu0 %v323
    %434 = vmatpush1.msra.mxu0 %v322
    %435 = vmatprep.subr.mxu0 %v327
    %436 = vmatpush1.msra.mxu0 %v326
    %437 = vmatprep.subr.mxu0 %v331
    %438 = vmatpush1.msra.mxu0 %v330
    %439 = vmatprep.subr.mxu0 %v335
    %440 = vmatpush1.msra.mxu0 %v334
    %441 = vmatprep.subr.mxu0 %v339
    %442 = vmatpush1.msra.mxu0 %v338
    %443 = vmatprep.subr.mxu0 0.0
    %444 = vmatpush1.msra.mxu0 0.0
    %445 = vmatprep.subr.mxu0 0.0
    %446 = vmatpush1.msra.mxu0 0.0
    %447 = vmatprep.subr.mxu0 0.0
    %448 = vmatpush1.msra.mxu0 0.0
    %449 = vmatprep.subr.mxu0 0.0
    %450 = vmatpush1.msra.mxu0 0.0
    %451 = vmatprep.subr.mxu0 0.0
    %452 = vmatpush1.msra.mxu0 0.0
    %453 = vmatprep.subr.mxu0 0.0
    %454 = vmatpush1.msra.mxu0 0.0
    %455 = vmatprep.subr.mxu0 0.0
    %456 = vmatpush1.msra.mxu0 0.0
    %457 = vmatprep.subr.mxu0 0.0
    %458 = vmatpush1.msra.mxu0 0.0
    %459 = vmatprep.subr.mxu0 0.0
    %460 = vmatpush1.msra.mxu0 0.0
    %461 = vmatprep.subr.mxu0 0.0
    %462 = vmatpush1.msra.mxu0 0.0
    %463 = vmatprep.subr.mxu0 0.0
    %464 = vmatpush1.msra.mxu0 0.0
    %465 = vmatprep.subr.mxu0 0.0
    %466 = vmatpush1.msra.mxu0 0.0
    %467 = vmatprep.subr.mxu0 0.0
    %468 = vmatpush1.msra.mxu0 0.0
    %469 = vmatprep.subr.mxu0 0.0
    %470 = vmatpush1.msra.mxu0 0.0
    %471 = vmatprep.subr.mxu0 0.0
    %472 = vmatpush1.msra.mxu0 0.0
    %473 = vmatprep.subr.mxu0 0.0
    %474 = vmatpush1.msra.mxu0 0.0
    %475 = vmatprep.mubr.f32.mxu0 0.0
    %476 = vmatmul.mubr.f32.gmra.mrb[0].mxu0 0.0
    %v477 = vpop.f32.mrb[0].mxu0
    %v478 = vadd.f32 0.0, %v477
    %v479 = vpop.f32.mrb[0].mxu0
    %v480 = vadd.f32 0.0, %v479
    %481 = vdwg.mxu0
    %v482 = vadd.f32 %v165, %v407
    %v483 = vadd.f32 %v167, %v409
    %v484 = vadd.f32 %v254, %v478
    %v485 = vadd.f32 %v256, %v480
    %v486 = vxor.u32 %v482, 2147483648
    %v487 = vmul.f32 %v486, 1.442695
    %v488 = vpow.pop %v487
    %v489 = vadd.f32 %v488, 1.0
    %v490 = vrcp.pop %v489
    %v491 = vmul.f32 1.0, %v490
    %v492 = vxor.u32 %v483, 2147483648
    %v493 = vmul.f32 %v492, 1.442695
    %v494 = vpow.pop %v493
    %v495 = vadd.f32 %v494, 1.0
    %v496 = vrcp.pop %v495
    %v497 = vmul.f32 1.0, %v496
    %v498 = vtanh.pop %v484
    %v499 = vxor.u32 %v485, 2147483648
    %v500 = vmul.f32 %v499, 1.442695
    %v501 = vpow.pop %v500
    %v502 = vadd.f32 %v501, 1.0
    %v503 = vrcp.pop %v502
    %v504 = vmul.f32 1.0, %v503
    %v505 = vmul.f32 %v497, 0.0
    %v506 = vmul.f32 %v491, %v498
    %v507 = vadd.f32 %v505, %v506
    %v508 = vtanh.pop %v507
    %v509 = vmul.f32 %v504, %v508
    %510 = vmatprep.subr.mxu0 %v277
    %511 = vmatpush1.msra.mxu0 %v276
    %512 = vmatprep.subr.mxu0 %v281
    %513 = vmatpush1.msra.mxu0 %v280
    %514 = vmatprep.subr.mxu0 %v285
    %515 = vmatpush1.msra.mxu0 %v284
    %516 = vmatprep.subr.mxu0 %v289
    %517 = vmatpush1.msra.mxu0 %v288
    %518 = vmatprep.subr.mxu0 %v293
    %519 = vmatpush1.msra.mxu0 %v292
    %520 = vmatprep.subr.mxu0 %v297
    %521 = vmatpush1.msra.mxu0 %v296
    %522 = vmatprep.subr.mxu0 %v301
    %523 = vmatpush1.msra.mxu0 %v300
    %524 = vmatprep.subr.mxu0 %v305
    %525 = vmatpush1.msra.mxu0 %v304
    %526 = vmatprep.subr.mxu0 %v309
    %527 = vmatpush1.msra.mxu0 %v308
    %528 = vmatprep.subr.mxu0 %v313
    %529 = vmatpush1.msra.mxu0 %v312
    %530 = vmatprep.subr.mxu0 %v317
    %531 = vmatpush1.msra.mxu0 %v316
    %532 = vmatprep.subr.mxu0 %v321
    %533 = vmatpush1.msra.mxu0 %v320
    %534 = vmatprep.subr.mxu0 %v325
    %535 = vmatpush1.msra.mxu0 %v324
    %536 = vmatprep.subr.mxu0 %v329
    %537 = vmatpush1.msra.mxu0 %v328
    %538 = vmatprep.subr.mxu0 %v333
    %539 = vmatpush1.msra.mxu0 %v332
    %540 = vmatprep.subr.mxu0 %v337
    %541 = vmatpush1.msra.mxu0 %v336
    %542 = vmatprep.subr.mxu0 0.0
    %543 = vmatpush1.msra.mxu0 0.0
    %544 = vmatprep.subr.mxu0 0.0
    %545 = vmatpush1.msra.mxu0 0.0
    %546 = vmatprep.subr.mxu0 0.0
    %547 = vmatpush1.msra.mxu0 0.0
    %548 = vmatprep.subr.mxu0 0.0
    %549 = vmatpush1.msra.mxu0 0.0
    %550 = vmatprep.subr.mxu0 0.0
    %551 = vmatpush1.msra.mxu0 0.0
    %552 = vmatprep.subr.mxu0 0.0
    %553 = vmatpush1.msra.mxu0 0.0
    %554 = vmatprep.subr.mxu0 0.0
    %555 = vmatpush1.msra.mxu0 0.0
    %556 = vmatprep.subr.mxu0 0.0
    %557 = vmatpush1.msra.mxu0 0.0
    %558 = vmatprep.subr.mxu0 0.0
    %559 = vmatpush1.msra.mxu0 0.0
    %560 = vmatprep.subr.mxu0 0.0
    %561 = vmatpush1.msra.mxu0 0.0
    %562 = vmatprep.subr.mxu0 0.0
    %563 = vmatpush1.msra.mxu0 0.0
    %564 = vmatprep.subr.mxu0 0.0
    %565 = vmatpush1.msra.mxu0 0.0
    %566 = vmatprep.subr.mxu0 0.0
    %567 = vmatpush1.msra.mxu0 0.0
    %568 = vmatprep.subr.mxu0 0.0
    %569 = vmatpush1.msra.mxu0 0.0
    %570 = vmatprep.subr.mxu0 0.0
    %571 = vmatpush1.msra.mxu0 0.0
    %572 = vmatprep.subr.mxu0 0.0
    %573 = vmatpush1.msra.mxu0 0.0
    %574 = vmatprep.mubr.f32.mxu0 0.0
    %575 = vmatmul.mubr.f32.gmra.mrb[0].mxu0 %v509
    %v576 = vpop.f32.mrb[0].mxu0
    %v577 = vadd.f32 0.0, %v576
    %v578 = vpop.f32.mrb[0].mxu0
    %v579 = vadd.f32 0.0, %v578
    %580 = vdwg.mxu0
    %581 = vmatprep.subr.mxu0 %v279
    %582 = vmatpush1.msra.mxu0 %v278
    %583 = vmatprep.subr.mxu0 %v283
    %584 = vmatpush1.msra.mxu0 %v282
    %585 = vmatprep.subr.mxu0 %v287
    %586 = vmatpush1.msra.mxu0 %v286
    %587 = vmatprep.subr.mxu0 %v291
    %588 = vmatpush1.msra.mxu0 %v290
    %589 = vmatprep.subr.mxu0 %v295
    %590 = vmatpush1.msra.mxu0 %v294
    %591 = vmatprep.subr.mxu0 %v299
    %592 = vmatpush1.msra.mxu0 %v298
    %593 = vmatprep.subr.mxu0 %v303
    %594 = vmatpush1.msra.mxu0 %v302
    %595 = vmatprep.subr.mxu0 %v307
    %596 = vmatpush1.msra.mxu0 %v306
    %597 = vmatprep.subr.mxu0 %v311
    %598 = vmatpush1.msra.mxu0 %v310
    %599 = vmatprep.subr.mxu0 %v315
    %600 = vmatpush1.msra.mxu0 %v314
    %601 = vmatprep.subr.mxu0 %v319
    %602 = vmatpush1.msra.mxu0 %v318
    %603 = vmatprep.subr.mxu0 %v323
    %604 = vmatpush1.msra.mxu0 %v322
    %605 = vmatprep.subr.mxu0 %v327
    %606 = vmatpush1.msra.mxu0 %v326
    %607 = vmatprep.subr.mxu0 %v331
    %608 = vmatpush1.msra.mxu0 %v330
    %609 = vmatprep.subr.mxu0 %v335
    %610 = vmatpush1.msra.mxu0 %v334
    %611 = vmatprep.subr.mxu0 %v339
    %612 = vmatpush1.msra.mxu0 %v338
    %613 = vmatprep.subr.mxu0 0.0
    %614 = vmatpush1.msra.mxu0 0.0
    %615 = vmatprep.subr.mxu0 0.0
    %616 = vmatpush1.msra.mxu0 0.0
    %617 = vmatprep.subr.mxu0 0.0
    %618 = vmatpush1.msra.mxu0 0.0
    %619 = vmatprep.subr.mxu0 0.0
    %620 = vmatpush1.msra.mxu0 0.0
    %621 = vmatprep.subr.mxu0 0.0
    %622 = vmatpush1.msra.mxu0 0.0
    %623 = vmatprep.subr.mxu0 0.0
    %624 = vmatpush1.msra.mxu0 0.0
    %625 = vmatprep.subr.mxu0 0.0
    %626 = vmatpush1.msra.mxu0 0.0
    %627 = vmatprep.subr.mxu0 0.0
    %628 = vmatpush1.msra.mxu0 0.0
    %629 = vmatprep.subr.mxu0 0.0
    %630 = vmatpush1.msra.mxu0 0.0
    %631 = vmatprep.subr.mxu0 0.0
    %632 = vmatpush1.msra.mxu0 0.0
    %633 = vmatprep.subr.mxu0 0.0
    %634 = vmatpush1.msra.mxu0 0.0
    %635 = vmatprep.subr.mxu0 0.0
    %636 = vmatpush1.msra.mxu0 0.0
    %637 = vmatprep.subr.mxu0 0.0
    %638 = vmatpush1.msra.mxu0 0.0
    %639 = vmatprep.subr.mxu0 0.0
    %640 = vmatpush1.msra.mxu0 0.0
    %641 = vmatprep.subr.mxu0 0.0
    %642 = vmatpush1.msra.mxu0 0.0
    %643 = vmatprep.subr.mxu0 0.0
    %644 = vmatpush1.msra.mxu0 0.0
    %645 = vmatprep.mubr.f32.mxu0 0.0
    %646 = vmatmul.mubr.f32.gmra.mrb[0].mxu0 %v509
    %v647 = vpop.f32.mrb[0].mxu0
    %v648 = vadd.f32 0.0, %v647
    %v649 = vpop.f32.mrb[0].mxu0
    %v650 = vadd.f32 0.0, %v649
    %651 = vdwg.mxu0
    %v656 = vrot.slane %v577, 4
    %v657 = vrot.slane %v579, 4
    %v658 = vrot.slane %v648, 4
    %v659 = vrot.slane %v650, 4
    %v664 = vadd.f32 %v165, %v656
    %v665 = vadd.f32 %v167, %v657
    %v666 = vadd.f32 %v254, %v658
    %v667 = vadd.f32 %v256, %v659
    %v668 = vxor.u32 %v664, 2147483648
    %v669 = vmul.f32 %v668, 1.442695
    %v670 = vpow.pop %v669
    %v671 = vadd.f32 %v670, 1.0
    %v672 = vrcp.pop %v671
    %v673 = vmul.f32 1.0, %v672
    %v674 = vxor.u32 %v665, 2147483648
    %v675 = vmul.f32 %v674, 1.442695
    %v676 = vpow.pop %v675
    %v677 = vadd.f32 %v676, 1.0
    %v678 = vrcp.pop %v677
    %v679 = vmul.f32 1.0, %v678
    %v680 = vtanh.pop %v666
    %v681 = vxor.u32 %v667, 2147483648
    %v682 = vmul.f32 %v681, 1.442695
    %v683 = vpow.pop %v682
    %v684 = vadd.f32 %v683, 1.0
    %v685 = vrcp.pop %v684
    %v686 = vmul.f32 1.0, %v685
    %v688 = vrot.slane %v507, 4
    %v690 = vmul.f32 %v679, %v688
    %v691 = vmul.f32 %v673, %v680
    %v692 = vadd.f32 %v690, %v691
    %v693 = vtanh.pop %v692
    %v694 = vmul.f32 %v686, %v693
    %v696 = vrot.slane %v694, 4
    %698 = vmatprep.subr.mxu0 %v277
    %699 = vmatpush1.msra.mxu0 %v276
    %700 = vmatprep.subr.mxu0 %v281
    %701 = vmatpush1.msra.mxu0 %v280
    %702 = vmatprep.subr.mxu0 %v285
    %703 = vmatpush1.msra.mxu0 %v284
    %704 = vmatprep.subr.mxu0 %v289
    %705 = vmatpush1.msra.mxu0 %v288
    %706 = vmatprep.subr.mxu0 %v293
    %707 = vmatpush1.msra.mxu0 %v292
    %708 = vmatprep.subr.mxu0 %v297
    %709 = vmatpush1.msra.mxu0 %v296
    %710 = vmatprep.subr.mxu0 %v301
    %711 = vmatpush1.msra.mxu0 %v300
    %712 = vmatprep.subr.mxu0 %v305
    %713 = vmatpush1.msra.mxu0 %v304
    %714 = vmatprep.subr.mxu0 %v309
    %715 = vmatpush1.msra.mxu0 %v308
    %716 = vmatprep.subr.mxu0 %v313
    %717 = vmatpush1.msra.mxu0 %v312
    %718 = vmatprep.subr.mxu0 %v317
    %719 = vmatpush1.msra.mxu0 %v316
    %720 = vmatprep.subr.mxu0 %v321
    %721 = vmatpush1.msra.mxu0 %v320
    %722 = vmatprep.subr.mxu0 %v325
    %723 = vmatpush1.msra.mxu0 %v324
    %724 = vmatprep.subr.mxu0 %v329
    %725 = vmatpush1.msra.mxu0 %v328
    %726 = vmatprep.subr.mxu0 %v333
    %727 = vmatpush1.msra.mxu0 %v332
    %728 = vmatprep.subr.mxu0 %v337
    %729 = vmatpush1.msra.mxu0 %v336
    %730 = vmatprep.subr.mxu0 0.0
    %731 = vmatpush1.msra.mxu0 0.0
    %732 = vmatprep.subr.mxu0 0.0
    %733 = vmatpush1.msra.mxu0 0.0
    %734 = vmatprep.subr.mxu0 0.0
    %735 = vmatpush1.msra.mxu0 0.0
    %736 = vmatprep.subr.mxu0 0.0
    %737 = vmatpush1.msra.mxu0 0.0
    %738 = vmatprep.subr.mxu0 0.0
    %739 = vmatpush1.msra.mxu0 0.0
    %740 = vmatprep.subr.mxu0 0.0
    %741 = vmatpush1.msra.mxu0 0.0
    %742 = vmatprep.subr.mxu0 0.0
    %743 = vmatpush1.msra.mxu0 0.0
    %744 = vmatprep.subr.mxu0 0.0
    %745 = vmatpush1.msra.mxu0 0.0
    %746 = vmatprep.subr.mxu0 0.0
    %747 = vmatpush1.msra.mxu0 0.0
    %748 = vmatprep.subr.mxu0 0.0
    %749 = vmatpush1.msra.mxu0 0.0
    %750 = vmatprep.subr.mxu0 0.0
    %751 = vmatpush1.msra.mxu0 0.0
    %752 = vmatprep.subr.mxu0 0.0
    %753 = vmatpush1.msra.mxu0 0.0
    %754 = vmatprep.subr.mxu0 0.0
    %755 = vmatpush1.msra.mxu0 0.0
    %756 = vmatprep.subr.mxu0 0.0
    %757 = vmatpush1.msra.mxu0 0.0
    %758 = vmatprep.subr.mxu0 0.0
    %759 = vmatpush1.msra.mxu0 0.0
    %760 = vmatprep.subr.mxu0 0.0
    %761 = vmatpush1.msra.mxu0 0.0
    %762 = vmatprep.mubr.f32.mxu0 0.0
    %763 = vmatmul.mubr.f32.gmra.mrb[0].mxu0 %v696
    %v764 = vpop.f32.mrb[0].mxu0
    %v765 = vadd.f32 0.0, %v764
    %v766 = vpop.f32.mrb[0].mxu0
    %v767 = vadd.f32 0.0, %v766
    %768 = vdwg.mxu0
    %769 = vmatprep.subr.mxu0 %v279
    %770 = vmatpush1.msra.mxu0 %v278
    %771 = vmatprep.subr.mxu0 %v283
    %772 = vmatpush1.msra.mxu0 %v282
    %773 = vmatprep.subr.mxu0 %v287
    %774 = vmatpush1.msra.mxu0 %v286
    %775 = vmatprep.subr.mxu0 %v291
    %776 = vmatpush1.msra.mxu0 %v290
    %777 = vmatprep.subr.mxu0 %v295
    %778 = vmatpush1.msra.mxu0 %v294
    %779 = vmatprep.subr.mxu0 %v299
    %780 = vmatpush1.msra.mxu0 %v298
    %781 = vmatprep.subr.mxu0 %v303
    %782 = vmatpush1.msra.mxu0 %v302
    %783 = vmatprep.subr.mxu0 %v307
    %784 = vmatpush1.msra.mxu0 %v306
    %785 = vmatprep.subr.mxu0 %v311
    %786 = vmatpush1.msra.mxu0 %v310
    %787 = vmatprep.subr.mxu0 %v315
    %788 = vmatpush1.msra.mxu0 %v314
    %789 = vmatprep.subr.mxu0 %v319
    %790 = vmatpush1.msra.mxu0 %v318
    %791 = vmatprep.subr.mxu0 %v323
    %792 = vmatpush1.msra.mxu0 %v322
    %793 = vmatprep.subr.mxu0 %v327
    %794 = vmatpush1.msra.mxu0 %v326
    %795 = vmatprep.subr.mxu0 %v331
    %796 = vmatpush1.msra.mxu0 %v330
    %797 = vmatprep.subr.mxu0 %v335
    %798 = vmatpush1.msra.mxu0 %v334
    %799 = vmatprep.subr.mxu0 %v339
    %800 = vmatpush1.msra.mxu0 %v338
    %801 = vmatprep.subr.mxu0 0.0
    %802 = vmatpush1.msra.mxu0 0.0
    %803 = vmatprep.subr.mxu0 0.0
    %804 = vmatpush1.msra.mxu0 0.0
    %805 = vmatprep.subr.mxu0 0.0
    %806 = vmatpush1.msra.mxu0 0.0
    %807 = vmatprep.subr.mxu0 0.0
    %808 = vmatpush1.msra.mxu0 0.0
    %809 = vmatprep.subr.mxu0 0.0
    %810 = vmatpush1.msra.mxu0 0.0
    %811 = vmatprep.subr.mxu0 0.0
    %812 = vmatpush1.msra.mxu0 0.0
    %813 = vmatprep.subr.mxu0 0.0
    %814 = vmatpush1.msra.mxu0 0.0
    %815 = vmatprep.subr.mxu0 0.0
    %816 = vmatpush1.msra.mxu0 0.0
    %817 = vmatprep.subr.mxu0 0.0
    %818 = vmatpush1.msra.mxu0 0.0
    %819 = vmatprep.subr.mxu0 0.0
    %820 = vmatpush1.msra.mxu0 0.0
    %821 = vmatprep.subr.mxu0 0.0
    %822 = vmatpush1.msra.mxu0 0.0
    %823 = vmatprep.subr.mxu0 0.0
    %824 = vmatpush1.msra.mxu0 0.0
    %825 = vmatprep.subr.mxu0 0.0
    %826 = vmatpush1.msra.mxu0 0.0
    %827 = vmatprep.subr.mxu0 0.0
    %828 = vmatpush1.msra.mxu0 0.0
    %829 = vmatprep.subr.mxu0 0.0
    %830 = vmatpush1.msra.mxu0 0.0
    %831 = vmatprep.subr.mxu0 0.0
    %832 = vmatpush1.msra.mxu0 0.0
    %833 = vmatprep.mubr.f32.mxu0 0.0
    %834 = vmatmul.mubr.f32.gmra.mrb[0].mxu0 %v696
    %v835 = vpop.f32.mrb[0].mxu0
    %v836 = vadd.f32 0.0, %v835
    %v837 = vpop.f32.mrb[0].mxu0
    %v838 = vadd.f32 0.0, %v837
    %839 = vdwg.mxu0
    %v840 = vadd.f32 %v171, %v765
    %v841 = vadd.f32 %v173, %v767
    %v842 = vadd.f32 %v260, %v836
    %v843 = vadd.f32 %v262, %v838
    %v844 = vxor.u32 %v840, 2147483648
    %v845 = vmul.f32 %v844, 1.442695
    %v846 = vpow.pop %v845
    %v847 = vadd.f32 %v846, 1.0
    %v848 = vrcp.pop %v847
    %v849 = vmul.f32 1.0, %v848
    %v850 = vxor.u32 %v841, 2147483648
    %v851 = vmul.f32 %v850, 1.442695
    %v852 = vpow.pop %v851
    %v853 = vadd.f32 %v852, 1.0
    %v854 = vrcp.pop %v853
    %v855 = vmul.f32 1.0, %v854
    %v856 = vtanh.pop %v842
    %v857 = vxor.u32 %v843, 2147483648
    %v858 = vmul.f32 %v857, 1.442695
    %v859 = vpow.pop %v858
    %v860 = vadd.f32 %v859, 1.0
    %v861 = vrcp.pop %v860
    %v862 = vmul.f32 1.0, %v861
    %v864 = vrot.slane %v692, 4
    %v866 = vmul.f32 %v855, %v864
    %v867 = vmul.f32 %v849, %v856
    %v868 = vadd.f32 %v866, %v867
    %v869 = vtanh.pop %v868
    %v870 = vmul.f32 %v862, %v869
    %871 = vmatprep.subr.mxu0 %v277
    %872 = vmatpush1.msra.mxu0 %v276
    %873 = vmatprep.subr.mxu0 %v281
    %874 = vmatpush1.msra.mxu0 %v280
    %875 = vmatprep.subr.mxu0 %v285
    %876 = vmatpush1.msra.mxu0 %v284
    %877 = vmatprep.subr.mxu0 %v289
    %878 = vmatpush1.msra.mxu0 %v288
    %879 = vmatprep.subr.mxu0 %v293
    %880 = vmatpush1.msra.mxu0 %v292
    %881 = vmatprep.subr.mxu0 %v297
    %882 = vmatpush1.msra.mxu0 %v296
    %883 = vmatprep.subr.mxu0 %v301
    %884 = vmatpush1.msra.mxu0 %v300
    %885 = vmatprep.subr.mxu0 %v305
    %886 = vmatpush1.msra.mxu0 %v304
    %887 = vmatprep.subr.mxu0 %v309
    %888 = vmatpush1.msra.mxu0 %v308
    %889 = vmatprep.subr.mxu0 %v313
    %890 = vmatpush1.msra.mxu0 %v312
    %891 = vmatprep.subr.mxu0 %v317
    %892 = vmatpush1.msra.mxu0 %v316
    %893 = vmatprep.subr.mxu0 %v321
    %894 = vmatpush1.msra.mxu0 %v320
    %895 = vmatprep.subr.mxu0 %v325
    %896 = vmatpush1.msra.mxu0 %v324
    %897 = vmatprep.subr.mxu0 %v329
    %898 = vmatpush1.msra.mxu0 %v328
    %899 = vmatprep.subr.mxu0 %v333
    %900 = vmatpush1.msra.mxu0 %v332
    %901 = vmatprep.subr.mxu0 %v337
    %902 = vmatpush1.msra.mxu0 %v336
    %903 = vmatprep.subr.mxu0 0.0
    %904 = vmatpush1.msra.mxu0 0.0
    %905 = vmatprep.subr.mxu0 0.0
    %906 = vmatpush1.msra.mxu0 0.0
    %907 = vmatprep.subr.mxu0 0.0
    %908 = vmatpush1.msra.mxu0 0.0
    %909 = vmatprep.subr.mxu0 0.0
    %910 = vmatpush1.msra.mxu0 0.0
    %911 = vmatprep.subr.mxu0 0.0
    %912 = vmatpush1.msra.mxu0 0.0
    %913 = vmatprep.subr.mxu0 0.0
    %914 = vmatpush1.msra.mxu0 0.0
    %915 = vmatprep.subr.mxu0 0.0
    %916 = vmatpush1.msra.mxu0 0.0
    %917 = vmatprep.subr.mxu0 0.0
    %918 = vmatpush1.msra.mxu0 0.0
    %919 = vmatprep.subr.mxu0 0.0
    %920 = vmatpush1.msra.mxu0 0.0
    %921 = vmatprep.subr.mxu0 0.0
    %922 = vmatpush1.msra.mxu0 0.0
    %923 = vmatprep.subr.mxu0 0.0
    %924 = vmatpush1.msra.mxu0 0.0
    %925 = vmatprep.subr.mxu0 0.0
    %926 = vmatpush1.msra.mxu0 0.0
    %927 = vmatprep.subr.mxu0 0.0
    %928 = vmatpush1.msra.mxu0 0.0
    %929 = vmatprep.subr.mxu0 0.0
    %930 = vmatpush1.msra.mxu0 0.0
    %931 = vmatprep.subr.mxu0 0.0
    %932 = vmatpush1.msra.mxu0 0.0
    %933 = vmatprep.subr.mxu0 0.0
    %934 = vmatpush1.msra.mxu0 0.0
    %935 = vmatprep.mubr.f32.mxu0 0.0
    %936 = vmatmul.mubr.f32.gmra.mrb[0].mxu0 %v870
    %v937 = vpop.f32.mrb[0].mxu0
    %v938 = vadd.f32 0.0, %v937
    %v939 = vpop.f32.mrb[0].mxu0
    %v940 = vadd.f32 0.0, %v939
    %941 = vdwg.mxu0
    %942 = vmatprep.subr.mxu0 %v279
    %943 = vmatpush1.msra.mxu0 %v278
    %944 = vmatprep.subr.mxu0 %v283
    %945 = vmatpush1.msra.mxu0 %v282
    %946 = vmatprep.subr.mxu0 %v287
    %947 = vmatpush1.msra.mxu0 %v286
    %948 = vmatprep.subr.mxu0 %v291
    %949 = vmatpush1.msra.mxu0 %v290
    %950 = vmatprep.subr.mxu0 %v295
    %951 = vmatpush1.msra.mxu0 %v294
    %952 = vmatprep.subr.mxu0 %v299
    %953 = vmatpush1.msra.mxu0 %v298
    %954 = vmatprep.subr.mxu0 %v303
    %955 = vmatpush1.msra.mxu0 %v302
    %956 = vmatprep.subr.mxu0 %v307
    %957 = vmatpush1.msra.mxu0 %v306
    %958 = vmatprep.subr.mxu0 %v311
    %959 = vmatpush1.msra.mxu0 %v310
    %960 = vmatprep.subr.mxu0 %v315
    %961 = vmatpush1.msra.mxu0 %v314
    %962 = vmatprep.subr.mxu0 %v319
    %963 = vmatpush1.msra.mxu0 %v318
    %964 = vmatprep.subr.mxu0 %v323
    %965 = vmatpush1.msra.mxu0 %v322
    %966 = vmatprep.subr.mxu0 %v327
    %967 = vmatpush1.msra.mxu0 %v326
    %968 = vmatprep.subr.mxu0 %v331
    %969 = vmatpush1.msra.mxu0 %v330
    %970 = vmatprep.subr.mxu0 %v335
    %971 = vmatpush1.msra.mxu0 %v334
    %972 = vmatprep.subr.mxu0 %v339
    %973 = vmatpush1.msra.mxu0 %v338
    %974 = vmatprep.subr.mxu0 0.0
    %975 = vmatpush1.msra.mxu0 0.0
    %976 = vmatprep.subr.mxu0 0.0
    %977 = vmatpush1.msra.mxu0 0.0
    %978 = vmatprep.subr.mxu0 0.0
    %979 = vmatpush1.msra.mxu0 0.0
    %980 = vmatprep.subr.mxu0 0.0
    %981 = vmatpush1.msra.mxu0 0.0
    %982 = vmatprep.subr.mxu0 0.0
    %983 = vmatpush1.msra.mxu0 0.0
    %984 = vmatprep.subr.mxu0 0.0
    %985 = vmatpush1.msra.mxu0 0.0
    %986 = vmatprep.subr.mxu0 0.0
    %987 = vmatpush1.msra.mxu0 0.0
    %988 = vmatprep.subr.mxu0 0.0
    %989 = vmatpush1.msra.mxu0 0.0
    %990 = vmatprep.subr.mxu0 0.0
    %991 = vmatpush1.msra.mxu0 0.0
    %992 = vmatprep.subr.mxu0 0.0
    %993 = vmatpush1.msra.mxu0 0.0
    %994 = vmatprep.subr.mxu0 0.0
    %995 = vmatpush1.msra.mxu0 0.0
    %996 = vmatprep.subr.mxu0 0.0
    %997 = vmatpush1.msra.mxu0 0.0
    %998 = vmatprep.subr.mxu0 0.0
    %999 = vmatpush1.msra.mxu0 0.0
    %1000 = vmatprep.subr.mxu0 0.0
    %1001 = vmatpush1.msra.mxu0 0.0
    %1002 = vmatprep.subr.mxu0 0.0
    %1003 = vmatpush1.msra.mxu0 0.0
    %1004 = vmatprep.subr.mxu0 0.0
    %1005 = vmatpush1.msra.mxu0 0.0
    %1006 = vmatprep.mubr.f32.mxu0 0.0
    %1007 = vmatmul.mubr.f32.gmra.mrb[0].mxu0 %v870
    %v1008 = vpop.f32.mrb[0].mxu0
    %v1009 = vadd.f32 0.0, %v1008
    %v1010 = vpop.f32.mrb[0].mxu0
    %v1011 = vadd.f32 0.0, %v1010
    %1012 = vdwg.mxu0
    %v1017 = vrot.slane %v938, 4
    %v1018 = vrot.slane %v940, 4
    %v1019 = vrot.slane %v1009, 4
    %v1020 = vrot.slane %v1011, 4
    %v1025 = vadd.f32 %v171, %v1017
    %v1026 = vadd.f32 %v173, %v1018
    %v1027 = vadd.f32 %v260, %v1019
    %v1028 = vadd.f32 %v262, %v1020
    %v1029 = vxor.u32 %v1025, 2147483648
    %v1030 = vmul.f32 %v1029, 1.442695
    %v1031 = vpow.pop %v1030
    %v1032 = vadd.f32 %v1031, 1.0
    %v1033 = vrcp.pop %v1032
    %v1034 = vmul.f32 1.0, %v1033
    %v1035 = vxor.u32 %v1026, 2147483648
    %v1036 = vmul.f32 %v1035, 1.442695
    %v1037 = vpow.pop %v1036
    %v1038 = vadd.f32 %v1037, 1.0
    %v1039 = vrcp.pop %v1038
    %v1040 = vmul.f32 1.0, %v1039
    %v1041 = vtanh.pop %v1027
    %v1042 = vxor.u32 %v1028, 2147483648
    %v1043 = vmul.f32 %v1042, 1.442695
    %v1044 = vpow.pop %v1043
    %v1045 = vadd.f32 %v1044, 1.0
    %v1046 = vrcp.pop %v1045
    %v1047 = vmul.f32 1.0, %v1046
    %v1049 = vrot.slane %v868, 4
    %v1051 = vmul.f32 %v1040, %v1049
    %v1052 = vmul.f32 %v1034, %v1041
    %v1053 = vadd.f32 %v1051, %v1052
    %v1054 = vtanh.pop %v1053
    %v1055 = vmul.f32 %v1047, %v1054
    %v1057 = vrot.slane %v1055, 4
    %1059 = vmatprep.subr.mxu0 %v277
    %1060 = vmatpush1.msra.mxu0 %v276
    %1061 = vmatprep.subr.mxu0 %v281
    %1062 = vmatpush1.msra.mxu0 %v280
    %1063 = vmatprep.subr.mxu0 %v285
    %1064 = vmatpush1.msra.mxu0 %v284
    %1065 = vmatprep.subr.mxu0 %v289
    %1066 = vmatpush1.msra.mxu0 %v288
    %1067 = vmatprep.subr.mxu0 %v293
    %1068 = vmatpush1.msra.mxu0 %v292
    %1069 = vmatprep.subr.mxu0 %v297
    %1070 = vmatpush1.msra.mxu0 %v296
    %1071 = vmatprep.subr.mxu0 %v301
    %1072 = vmatpush1.msra.mxu0 %v300
    %1073 = vmatprep.subr.mxu0 %v305
    %1074 = vmatpush1.msra.mxu0 %v304
    %1075 = vmatprep.subr.mxu0 %v309
    %1076 = vmatpush1.msra.mxu0 %v308
    %1077 = vmatprep.subr.mxu0 %v313
    %1078 = vmatpush1.msra.mxu0 %v312
    %1079 = vmatprep.subr.mxu0 %v317
    %1080 = vmatpush1.msra.mxu0 %v316
    %1081 = vmatprep.subr.mxu0 %v321
    %1082 = vmatpush1.msra.mxu0 %v320
    %1083 = vmatprep.subr.mxu0 %v325
    %1084 = vmatpush1.msra.mxu0 %v324
    %1085 = vmatprep.subr.mxu0 %v329
    %1086 = vmatpush1.msra.mxu0 %v328
    %1087 = vmatprep.subr.mxu0 %v333
    %1088 = vmatpush1.msra.mxu0 %v332
    %1089 = vmatprep.subr.mxu0 %v337
    %1090 = vmatpush1.msra.mxu0 %v336
    %1091 = vmatprep.subr.mxu0 0.0
    %1092 = vmatpush1.msra.mxu0 0.0
    %1093 = vmatprep.subr.mxu0 0.0
    %1094 = vmatpush1.msra.mxu0 0.0
    %1095 = vmatprep.subr.mxu0 0.0
    %1096 = vmatpush1.msra.mxu0 0.0
    %1097 = vmatprep.subr.mxu0 0.0
    %1098 = vmatpush1.msra.mxu0 0.0
    %1099 = vmatprep.subr.mxu0 0.0
    %1100 = vmatpush1.msra.mxu0 0.0
    %1101 = vmatprep.subr.mxu0 0.0
    %1102 = vmatpush1.msra.mxu0 0.0
    %1103 = vmatprep.subr.mxu0 0.0
    %1104 = vmatpush1.msra.mxu0 0.0
    %1105 = vmatprep.subr.mxu0 0.0
    %1106 = vmatpush1.msra.mxu0 0.0
    %1107 = vmatprep.subr.mxu0 0.0
    %1108 = vmatpush1.msra.mxu0 0.0
    %1109 = vmatprep.subr.mxu0 0.0
    %1110 = vmatpush1.msra.mxu0 0.0
    %1111 = vmatprep.subr.mxu0 0.0
    %1112 = vmatpush1.msra.mxu0 0.0
    %1113 = vmatprep.subr.mxu0 0.0
    %1114 = vmatpush1.msra.mxu0 0.0
    %1115 = vmatprep.subr.mxu0 0.0
    %1116 = vmatpush1.msra.mxu0 0.0
    %1117 = vmatprep.subr.mxu0 0.0
    %1118 = vmatpush1.msra.mxu0 0.0
    %1119 = vmatprep.subr.mxu0 0.0
    %1120 = vmatpush1.msra.mxu0 0.0
    %1121 = vmatprep.subr.mxu0 0.0
    %1122 = vmatpush1.msra.mxu0 0.0
    %1123 = vmatprep.mubr.f32.mxu0 0.0
    %1124 = vmatmul.mubr.f32.gmra.mrb[0].mxu0 %v1057
    %v1125 = vpop.f32.mrb[0].mxu0
    %v1126 = vadd.f32 0.0, %v1125
    %v1127 = vpop.f32.mrb[0].mxu0
    %v1128 = vadd.f32 0.0, %v1127
    %1129 = vdwg.mxu0
    %1130 = vmatprep.subr.mxu0 %v279
    %1131 = vmatpush1.msra.mxu0 %v278
    %1132 = vmatprep.subr.mxu0 %v283
    %1133 = vmatpush1.msra.mxu0 %v282
    %1134 = vmatprep.subr.mxu0 %v287
    %1135 = vmatpush1.msra.mxu0 %v286
    %1136 = vmatprep.subr.mxu0 %v291
    %1137 = vmatpush1.msra.mxu0 %v290
    %1138 = vmatprep.subr.mxu0 %v295
    %1139 = vmatpush1.msra.mxu0 %v294
    %1140 = vmatprep.subr.mxu0 %v299
    %1141 = vmatpush1.msra.mxu0 %v298
    %1142 = vmatprep.subr.mxu0 %v303
    %1143 = vmatpush1.msra.mxu0 %v302
    %1144 = vmatprep.subr.mxu0 %v307
    %1145 = vmatpush1.msra.mxu0 %v306
    %1146 = vmatprep.subr.mxu0 %v311
    %1147 = vmatpush1.msra.mxu0 %v310
    %1148 = vmatprep.subr.mxu0 %v315
    %1149 = vmatpush1.msra.mxu0 %v314
    %1150 = vmatprep.subr.mxu0 %v319
    %1151 = vmatpush1.msra.mxu0 %v318
    %1152 = vmatprep.subr.mxu0 %v323
    %1153 = vmatpush1.msra.mxu0 %v322
    %1154 = vmatprep.subr.mxu0 %v327
    %1155 = vmatpush1.msra.mxu0 %v326
    %1156 = vmatprep.subr.mxu0 %v331
    %1157 = vmatpush1.msra.mxu0 %v330
    %1158 = vmatprep.subr.mxu0 %v335
    %1159 = vmatpush1.msra.mxu0 %v334
    %1160 = vmatprep.subr.mxu0 %v339
    %1161 = vmatpush1.msra.mxu0 %v338
    %1162 = vmatprep.subr.mxu0 0.0
    %1163 = vmatpush1.msra.mxu0 0.0
    %1164 = vmatprep.subr.mxu0 0.0
    %1165 = vmatpush1.msra.mxu0 0.0
    %1166 = vmatprep.subr.mxu0 0.0
    %1167 = vmatpush1.msra.mxu0 0.0
    %1168 = vmatprep.subr.mxu0 0.0
    %1169 = vmatpush1.msra.mxu0 0.0
    %1170 = vmatprep.subr.mxu0 0.0
    %1171 = vmatpush1.msra.mxu0 0.0
    %1172 = vmatprep.subr.mxu0 0.0
    %1173 = vmatpush1.msra.mxu0 0.0
    %1174 = vmatprep.subr.mxu0 0.0
    %1175 = vmatpush1.msra.mxu0 0.0
    %1176 = vmatprep.subr.mxu0 0.0
    %1177 = vmatpush1.msra.mxu0 0.0
    %1178 = vmatprep.subr.mxu0 0.0
    %1179 = vmatpush1.msra.mxu0 0.0
    %1180 = vmatprep.subr.mxu0 0.0
    %1181 = vmatpush1.msra.mxu0 0.0
    %1182 = vmatprep.subr.mxu0 0.0
    %1183 = vmatpush1.msra.mxu0 0.0
    %1184 = vmatprep.subr.mxu0 0.0
    %1185 = vmatpush1.msra.mxu0 0.0
    %1186 = vmatprep.subr.mxu0 0.0
    %1187 = vmatpush1.msra.mxu0 0.0
    %1188 = vmatprep.subr.mxu0 0.0
    %1189 = vmatpush1.msra.mxu0 0.0
    %1190 = vmatprep.subr.mxu0 0.0
    %1191 = vmatpush1.msra.mxu0 0.0
    %1192 = vmatprep.subr.mxu0 0.0
    %1193 = vmatpush1.msra.mxu0 0.0
    %1194 = vmatprep.mubr.f32.mxu0 0.0
    %1195 = vmatmul.mubr.f32.gmra.mrb[0].mxu0 %v1057
    %v1196 = vpop.f32.mrb[0].mxu0
    %v1197 = vadd.f32 0.0, %v1196
    %v1198 = vpop.f32.mrb[0].mxu0
    %v1199 = vadd.f32 0.0, %v1198
    %1200 = vdwg.mxu0
    %v1201 = vadd.f32 %v177, %v1126
    %v1202 = vadd.f32 %v179, %v1128
    %v1203 = vadd.f32 %v266, %v1197
    %v1204 = vadd.f32 %v268, %v1199
    %v1205 = vxor.u32 %v1201, 2147483648
    %v1206 = vmul.f32 %v1205, 1.442695
    %v1207 = vpow.pop %v1206
    %v1208 = vadd.f32 %v1207, 1.0
    %v1209 = vrcp.pop %v1208
    %v1210 = vmul.f32 1.0, %v1209
    %v1211 = vxor.u32 %v1202, 2147483648
    %v1212 = vmul.f32 %v1211, 1.442695
    %v1213 = vpow.pop %v1212
    %v1214 = vadd.f32 %v1213, 1.0
    %v1215 = vrcp.pop %v1214
    %v1216 = vmul.f32 1.0, %v1215
    %v1217 = vtanh.pop %v1203
    %v1218 = vxor.u32 %v1204, 2147483648
    %v1219 = vmul.f32 %v1218, 1.442695
    %v1220 = vpow.pop %v1219
    %v1221 = vadd.f32 %v1220, 1.0
    %v1222 = vrcp.pop %v1221
    %v1223 = vmul.f32 1.0, %v1222
    %v1225 = vrot.slane %v1053, 4
    %v1227 = vmul.f32 %v1216, %v1225
    %v1228 = vmul.f32 %v1210, %v1217
    %v1229 = vadd.f32 %v1227, %v1228
    %v1230 = vtanh.pop %v1229
    %v1231 = vmul.f32 %v1223, %v1230
    %1232 = vmatprep.subr.mxu0 %v277
    %1233 = vmatpush1.msra.mxu0 %v276
    %1234 = vmatprep.subr.mxu0 %v281
    %1235 = vmatpush1.msra.mxu0 %v280
    %1236 = vmatprep.subr.mxu0 %v285
    %1237 = vmatpush1.msra.mxu0 %v284
    %1238 = vmatprep.subr.mxu0 %v289
    %1239 = vmatpush1.msra.mxu0 %v288
    %1240 = vmatprep.subr.mxu0 %v293
    %1241 = vmatpush1.msra.mxu0 %v292
    %1242 = vmatprep.subr.mxu0 %v297
    %1243 = vmatpush1.msra.mxu0 %v296
    %1244 = vmatprep.subr.mxu0 %v301
    %1245 = vmatpush1.msra.mxu0 %v300
    %1246 = vmatprep.subr.mxu0 %v305
    %1247 = vmatpush1.msra.mxu0 %v304
    %1248 = vmatprep.subr.mxu0 %v309
    %1249 = vmatpush1.msra.mxu0 %v308
    %1250 = vmatprep.subr.mxu0 %v313
    %1251 = vmatpush1.msra.mxu0 %v312
    %1252 = vmatprep.subr.mxu0 %v317
    %1253 = vmatpush1.msra.mxu0 %v316
    %1254 = vmatprep.subr.mxu0 %v321
    %1255 = vmatpush1.msra.mxu0 %v320
    %1256 = vmatprep.subr.mxu0 %v325
    %1257 = vmatpush1.msra.mxu0 %v324
    %1258 = vmatprep.subr.mxu0 %v329
    %1259 = vmatpush1.msra.mxu0 %v328
    %1260 = vmatprep.subr.mxu0 %v333
    %1261 = vmatpush1.msra.mxu0 %v332
    %1262 = vmatprep.subr.mxu0 %v337
    %1263 = vmatpush1.msra.mxu0 %v336
    %1264 = vmatprep.subr.mxu0 0.0
    %1265 = vmatpush1.msra.mxu0 0.0
    %1266 = vmatprep.subr.mxu0 0.0
    %1267 = vmatpush1.msra.mxu0 0.0
    %1268 = vmatprep.subr.mxu0 0.0
    %1269 = vmatpush1.msra.mxu0 0.0
    %1270 = vmatprep.subr.mxu0 0.0
    %1271 = vmatpush1.msra.mxu0 0.0
    %1272 = vmatprep.subr.mxu0 0.0
    %1273 = vmatpush1.msra.mxu0 0.0
    %1274 = vmatprep.subr.mxu0 0.0
    %1275 = vmatpush1.msra.mxu0 0.0
    %1276 = vmatprep.subr.mxu0 0.0
    %1277 = vmatpush1.msra.mxu0 0.0
    %1278 = vmatprep.subr.mxu0 0.0
    %1279 = vmatpush1.msra.mxu0 0.0
    %1280 = vmatprep.subr.mxu0 0.0
    %1281 = vmatpush1.msra.mxu0 0.0
    %1282 = vmatprep.subr.mxu0 0.0
    %1283 = vmatpush1.msra.mxu0 0.0
    %1284 = vmatprep.subr.mxu0 0.0
    %1285 = vmatpush1.msra.mxu0 0.0
    %1286 = vmatprep.subr.mxu0 0.0
    %1287 = vmatpush1.msra.mxu0 0.0
    %1288 = vmatprep.subr.mxu0 0.0
    %1289 = vmatpush1.msra.mxu0 0.0
    %1290 = vmatprep.subr.mxu0 0.0
    %1291 = vmatpush1.msra.mxu0 0.0
    %1292 = vmatprep.subr.mxu0 0.0
    %1293 = vmatpush1.msra.mxu0 0.0
    %1294 = vmatprep.subr.mxu0 0.0
    %1295 = vmatpush1.msra.mxu0 0.0
    %1296 = vmatprep.mubr.f32.mxu0 0.0
    %1297 = vmatmul.mubr.f32.gmra.mrb[0].mxu0 %v1231
    %v1298 = vpop.f32.mrb[0].mxu0
    %v1299 = vadd.f32 0.0, %v1298
    %v1300 = vpop.f32.mrb[0].mxu0
    %v1301 = vadd.f32 0.0, %v1300
    %1302 = vdwg.mxu0
    %1303 = vmatprep.subr.mxu0 %v279
    %1304 = vmatpush1.msra.mxu0 %v278
    %1305 = vmatprep.subr.mxu0 %v283
    %1306 = vmatpush1.msra.mxu0 %v282
    %1307 = vmatprep.subr.mxu0 %v287
    %1308 = vmatpush1.msra.mxu0 %v286
    %1309 = vmatprep.subr.mxu0 %v291
    %1310 = vmatpush1.msra.mxu0 %v290
    %1311 = vmatprep.subr.mxu0 %v295
    %1312 = vmatpush1.msra.mxu0 %v294
    %1313 = vmatprep.subr.mxu0 %v299
    %1314 = vmatpush1.msra.mxu0 %v298
    %1315 = vmatprep.subr.mxu0 %v303
    %1316 = vmatpush1.msra.mxu0 %v302
    %1317 = vmatprep.subr.mxu0 %v307
    %1318 = vmatpush1.msra.mxu0 %v306
    %1319 = vmatprep.subr.mxu0 %v311
    %1320 = vmatpush1.msra.mxu0 %v310
    %1321 = vmatprep.subr.mxu0 %v315
    %1322 = vmatpush1.msra.mxu0 %v314
    %1323 = vmatprep.subr.mxu0 %v319
    %1324 = vmatpush1.msra.mxu0 %v318
    %1325 = vmatprep.subr.mxu0 %v323
    %1326 = vmatpush1.msra.mxu0 %v322
    %1327 = vmatprep.subr.mxu0 %v327
    %1328 = vmatpush1.msra.mxu0 %v326
    %1329 = vmatprep.subr.mxu0 %v331
    %1330 = vmatpush1.msra.mxu0 %v330
    %1331 = vmatprep.subr.mxu0 %v335
    %1332 = vmatpush1.msra.mxu0 %v334
    %1333 = vmatprep.subr.mxu0 %v339
    %1334 = vmatpush1.msra.mxu0 %v338
    %1335 = vmatprep.subr.mxu0 0.0
    %1336 = vmatpush1.msra.mxu0 0.0
    %1337 = vmatprep.subr.mxu0 0.0
    %1338 = vmatpush1.msra.mxu0 0.0
    %1339 = vmatprep.subr.mxu0 0.0
    %1340 = vmatpush1.msra.mxu0 0.0
    %1341 = vmatprep.subr.mxu0 0.0
    %1342 = vmatpush1.msra.mxu0 0.0
    %1343 = vmatprep.subr.mxu0 0.0
    %1344 = vmatpush1.msra.mxu0 0.0
    %1345 = vmatprep.subr.mxu0 0.0
    %1346 = vmatpush1.msra.mxu0 0.0
    %1347 = vmatprep.subr.mxu0 0.0
    %1348 = vmatpush1.msra.mxu0 0.0
    %1349 = vmatprep.subr.mxu0 0.0
    %1350 = vmatpush1.msra.mxu0 0.0
    %1351 = vmatprep.subr.mxu0 0.0
    %1352 = vmatpush1.msra.mxu0 0.0
    %1353 = vmatprep.subr.mxu0 0.0
    %1354 = vmatpush1.msra.mxu0 0.0
    %1355 = vmatprep.subr.mxu0 0.0
    %1356 = vmatpush1.msra.mxu0 0.0
    %1357 = vmatprep.subr.mxu0 0.0
    %1358 = vmatpush1.msra.mxu0 0.0
    %1359 = vmatprep.subr.mxu0 0.0
    %1360 = vmatpush1.msra.mxu0 0.0
    %1361 = vmatprep.subr.mxu0 0.0
    %1362 = vmatpush1.msra.mxu0 0.0
    %1363 = vmatprep.subr.mxu0 0.0
    %1364 = vmatpush1.msra.mxu0 0.0
    %1365 = vmatprep.subr.mxu0 0.0
    %1366 = vmatpush1.msra.mxu0 0.0
    %1367 = vmatprep.mubr.f32.mxu0 0.0
    %1368 = vmatmul.mubr.f32.gmra.mrb[0].mxu0 %v1231
    %v1369 = vpop.f32.mrb[0].mxu0
    %v1370 = vadd.f32 0.0, %v1369
    %v1371 = vpop.f32.mrb[0].mxu0
    %v1372 = vadd.f32 0.0, %v1371
    %1373 = vdwg.mxu0
    %v1378 = vrot.slane %v1299, 4
    %v1379 = vrot.slane %v1301, 4
    %v1380 = vrot.slane %v1370, 4
    %v1381 = vrot.slane %v1372, 4
    %v1386 = vadd.f32 %v177, %v1378
    %v1387 = vadd.f32 %v179, %v1379
    %v1388 = vadd.f32 %v266, %v1380
    %v1389 = vadd.f32 %v268, %v1381
    %v1390 = vxor.u32 %v1386, 2147483648
    %v1391 = vmul.f32 %v1390, 1.442695
    %v1392 = vpow.pop %v1391
    %v1393 = vadd.f32 %v1392, 1.0
    %v1394 = vrcp.pop %v1393
    %v1395 = vmul.f32 1.0, %v1394
    %v1396 = vxor.u32 %v1387, 2147483648
    %v1397 = vmul.f32 %v1396, 1.442695
    %v1398 = vpow.pop %v1397
    %v1399 = vadd.f32 %v1398, 1.0
    %v1400 = vrcp.pop %v1399
    %v1401 = vmul.f32 1.0, %v1400
    %v1402 = vtanh.pop %v1388
    %v1403 = vxor.u32 %v1389, 2147483648
    %v1404 = vmul.f32 %v1403, 1.442695
    %v1405 = vpow.pop %v1404
    %v1406 = vadd.f32 %v1405, 1.0
    %v1407 = vrcp.pop %v1406
    %v1408 = vmul.f32 1.0, %v1407
    %v1410 = vrot.slane %v1229, 4
    %v1412 = vmul.f32 %v1401, %v1410
    %v1413 = vmul.f32 %v1395, %v1402
    %v1414 = vadd.f32 %v1412, %v1413
    %v1415 = vtanh.pop %v1414
    %v1416 = vmul.f32 %v1408, %v1415
    %v1418 = vrot.slane %v1416, 4
    %1420 = vmatprep.subr.mxu0 %v277
    %1421 = vmatpush1.msra.mxu0 %v276
    %1422 = vmatprep.subr.mxu0 %v281
    %1423 = vmatpush1.msra.mxu0 %v280
    %1424 = vmatprep.subr.mxu0 %v285
    %1425 = vmatpush1.msra.mxu0 %v284
    %1426 = vmatprep.subr.mxu0 %v289
    %1427 = vmatpush1.msra.mxu0 %v288
    %1428 = vmatprep.subr.mxu0 %v293
    %1429 = vmatpush1.msra.mxu0 %v292
    %1430 = vmatprep.subr.mxu0 %v297
    %1431 = vmatpush1.msra.mxu0 %v296
    %1432 = vmatprep.subr.mxu0 %v301
    %1433 = vmatpush1.msra.mxu0 %v300
    %1434 = vmatprep.subr.mxu0 %v305
    %1435 = vmatpush1.msra.mxu0 %v304
    %1436 = vmatprep.subr.mxu0 %v309
    %1437 = vmatpush1.msra.mxu0 %v308
    %1438 = vmatprep.subr.mxu0 %v313
    %1439 = vmatpush1.msra.mxu0 %v312
    %1440 = vmatprep.subr.mxu0 %v317
    %1441 = vmatpush1.msra.mxu0 %v316
    %1442 = vmatprep.subr.mxu0 %v321
    %1443 = vmatpush1.msra.mxu0 %v320
    %1444 = vmatprep.subr.mxu0 %v325
    %1445 = vmatpush1.msra.mxu0 %v324
    %1446 = vmatprep.subr.mxu0 %v329
    %1447 = vmatpush1.msra.mxu0 %v328
    %1448 = vmatprep.subr.mxu0 %v333
    %1449 = vmatpush1.msra.mxu0 %v332
    %1450 = vmatprep.subr.mxu0 %v337
    %1451 = vmatpush1.msra.mxu0 %v336
    %1452 = vmatprep.subr.mxu0 0.0
    %1453 = vmatpush1.msra.mxu0 0.0
    %1454 = vmatprep.subr.mxu0 0.0
    %1455 = vmatpush1.msra.mxu0 0.0
    %1456 = vmatprep.subr.mxu0 0.0
    %1457 = vmatpush1.msra.mxu0 0.0
    %1458 = vmatprep.subr.mxu0 0.0
    %1459 = vmatpush1.msra.mxu0 0.0
    %1460 = vmatprep.subr.mxu0 0.0
    %1461 = vmatpush1.msra.mxu0 0.0
    %1462 = vmatprep.subr.mxu0 0.0
    %1463 = vmatpush1.msra.mxu0 0.0
    %1464 = vmatprep.subr.mxu0 0.0
    %1465 = vmatpush1.msra.mxu0 0.0
    %1466 = vmatprep.subr.mxu0 0.0
    %1467 = vmatpush1.msra.mxu0 0.0
    %1468 = vmatprep.subr.mxu0 0.0
    %1469 = vmatpush1.msra.mxu0 0.0
    %1470 = vmatprep.subr.mxu0 0.0
    %1471 = vmatpush1.msra.mxu0 0.0
    %1472 = vmatprep.subr.mxu0 0.0
    %1473 = vmatpush1.msra.mxu0 0.0
    %1474 = vmatprep.subr.mxu0 0.0
    %1475 = vmatpush1.msra.mxu0 0.0
    %1476 = vmatprep.subr.mxu0 0.0
    %1477 = vmatpush1.msra.mxu0 0.0
    %1478 = vmatprep.subr.mxu0 0.0
    %1479 = vmatpush1.msra.mxu0 0.0
    %1480 = vmatprep.subr.mxu0 0.0
    %1481 = vmatpush1.msra.mxu0 0.0
    %1482 = vmatprep.subr.mxu0 0.0
    %1483 = vmatpush1.msra.mxu0 0.0
    %1484 = vmatprep.mubr.f32.mxu0 0.0
    %1485 = vmatmul.mubr.f32.gmra.mrb[0].mxu0 %v1418
    %v1486 = vpop.f32.mrb[0].mxu0
    %v1487 = vadd.f32 0.0, %v1486
    %v1488 = vpop.f32.mrb[0].mxu0
    %v1489 = vadd.f32 0.0, %v1488
    %1490 = vdwg.mxu0
    %1491 = vmatprep.subr.mxu0 %v279
    %1492 = vmatpush1.msra.mxu0 %v278
    %1493 = vmatprep.subr.mxu0 %v283
    %1494 = vmatpush1.msra.mxu0 %v282
    %1495 = vmatprep.subr.mxu0 %v287
    %1496 = vmatpush1.msra.mxu0 %v286
    %1497 = vmatprep.subr.mxu0 %v291
    %1498 = vmatpush1.msra.mxu0 %v290
    %1499 = vmatprep.subr.mxu0 %v295
    %1500 = vmatpush1.msra.mxu0 %v294
    %1501 = vmatprep.subr.mxu0 %v299
    %1502 = vmatpush1.msra.mxu0 %v298
    %1503 = vmatprep.subr.mxu0 %v303
    %1504 = vmatpush1.msra.mxu0 %v302
    %1505 = vmatprep.subr.mxu0 %v307
    %1506 = vmatpush1.msra.mxu0 %v306
    %1507 = vmatprep.subr.mxu0 %v311
    %1508 = vmatpush1.msra.mxu0 %v310
    %1509 = vmatprep.subr.mxu0 %v315
    %1510 = vmatpush1.msra.mxu0 %v314
    %1511 = vmatprep.subr.mxu0 %v319
    %1512 = vmatpush1.msra.mxu0 %v318
    %1513 = vmatprep.subr.mxu0 %v323
    %1514 = vmatpush1.msra.mxu0 %v322
    %1515 = vmatprep.subr.mxu0 %v327
    %1516 = vmatpush1.msra.mxu0 %v326
    %1517 = vmatprep.subr.mxu0 %v331
    %1518 = vmatpush1.msra.mxu0 %v330
    %1519 = vmatprep.subr.mxu0 %v335
    %1520 = vmatpush1.msra.mxu0 %v334
    %1521 = vmatprep.subr.mxu0 %v339
    %1522 = vmatpush1.msra.mxu0 %v338
    %1523 = vmatprep.subr.mxu0 0.0
    %1524 = vmatpush1.msra.mxu0 0.0
    %1525 = vmatprep.subr.mxu0 0.0
    %1526 = vmatpush1.msra.mxu0 0.0
    %1527 = vmatprep.subr.mxu0 0.0
    %1528 = vmatpush1.msra.mxu0 0.0
    %1529 = vmatprep.subr.mxu0 0.0
    %1530 = vmatpush1.msra.mxu0 0.0
    %1531 = vmatprep.subr.mxu0 0.0
    %1532 = vmatpush1.msra.mxu0 0.0
    %1533 = vmatprep.subr.mxu0 0.0
    %1534 = vmatpush1.msra.mxu0 0.0
    %1535 = vmatprep.subr.mxu0 0.0
    %1536 = vmatpush1.msra.mxu0 0.0
    %1537 = vmatprep.subr.mxu0 0.0
    %1538 = vmatpush1.msra.mxu0 0.0
    %1539 = vmatprep.subr.mxu0 0.0
    %1540 = vmatpush1.msra.mxu0 0.0
    %1541 = vmatprep.subr.mxu0 0.0
    %1542 = vmatpush1.msra.mxu0 0.0
    %1543 = vmatprep.subr.mxu0 0.0
    %1544 = vmatpush1.msra.mxu0 0.0
    %1545 = vmatprep.subr.mxu0 0.0
    %1546 = vmatpush1.msra.mxu0 0.0
    %1547 = vmatprep.subr.mxu0 0.0
    %1548 = vmatpush1.msra.mxu0 0.0
    %1549 = vmatprep.subr.mxu0 0.0
    %1550 = vmatpush1.msra.mxu0 0.0
    %1551 = vmatprep.subr.mxu0 0.0
    %1552 = vmatpush1.msra.mxu0 0.0
    %1553 = vmatprep.subr.mxu0 0.0
    %1554 = vmatpush1.msra.mxu0 0.0
    %1555 = vmatprep.mubr.f32.mxu0 0.0
    %1556 = vmatmul.mubr.f32.gmra.mrb[0].mxu0 %v1418
    %v1557 = vpop.f32.mrb[0].mxu0
    %v1558 = vadd.f32 0.0, %v1557
    %v1559 = vpop.f32.mrb[0].mxu0
    %v1560 = vadd.f32 0.0, %v1559
    %1561 = vdwg.mxu0
    %v1562 = vadd.f32 %v183, %v1487
    %v1563 = vadd.f32 %v185, %v1489
    %v1564 = vadd.f32 %v272, %v1558
    %v1565 = vadd.f32 %v274, %v1560
    %v1566 = vxor.u32 %v1562, 2147483648
    %v1567 = vmul.f32 %v1566, 1.442695
    %v1568 = vpow.pop %v1567
    %v1569 = vadd.f32 %v1568, 1.0
    %v1570 = vrcp.pop %v1569
    %v1571 = vmul.f32 1.0, %v1570
    %v1572 = vxor.u32 %v1563, 2147483648
    %v1573 = vmul.f32 %v1572, 1.442695
    %v1574 = vpow.pop %v1573
    %v1575 = vadd.f32 %v1574, 1.0
    %v1576 = vrcp.pop %v1575
    %v1577 = vmul.f32 1.0, %v1576
    %v1578 = vtanh.pop %v1564
    %v1579 = vxor.u32 %v1565, 2147483648
    %v1580 = vmul.f32 %v1579, 1.442695
    %v1581 = vpow.pop %v1580
    %v1582 = vadd.f32 %v1581, 1.0
    %v1583 = vrcp.pop %v1582
    %v1584 = vmul.f32 1.0, %v1583
    %v1586 = vrot.slane %v1414, 4
    %v1588 = vmul.f32 %v1577, %v1586
    %v1589 = vmul.f32 %v1571, %v1578
    %v1590 = vadd.f32 %v1588, %v1589
    %v1591 = vtanh.pop %v1590
    %v1592 = vmul.f32 %v1584, %v1591
    %1593 = vmatprep.subr.mxu0 %v277
    %1594 = vmatpush1.msra.mxu0 %v276
    %1595 = vmatprep.subr.mxu0 %v281
    %1596 = vmatpush1.msra.mxu0 %v280
    %1597 = vmatprep.subr.mxu0 %v285
    %1598 = vmatpush1.msra.mxu0 %v284
    %1599 = vmatprep.subr.mxu0 %v289
    %1600 = vmatpush1.msra.mxu0 %v288
    %1601 = vmatprep.subr.mxu0 %v293
    %1602 = vmatpush1.msra.mxu0 %v292
    %1603 = vmatprep.subr.mxu0 %v297
    %1604 = vmatpush1.msra.mxu0 %v296
    %1605 = vmatprep.subr.mxu0 %v301
    %1606 = vmatpush1.msra.mxu0 %v300
    %1607 = vmatprep.subr.mxu0 %v305
    %1608 = vmatpush1.msra.mxu0 %v304
    %1609 = vmatprep.subr.mxu0 %v309
    %1610 = vmatpush1.msra.mxu0 %v308
    %1611 = vmatprep.subr.mxu0 %v313
    %1612 = vmatpush1.msra.mxu0 %v312
    %1613 = vmatprep.subr.mxu0 %v317
    %1614 = vmatpush1.msra.mxu0 %v316
    %1615 = vmatprep.subr.mxu0 %v321
    %1616 = vmatpush1.msra.mxu0 %v320
    %1617 = vmatprep.subr.mxu0 %v325
    %1618 = vmatpush1.msra.mxu0 %v324
    %1619 = vmatprep.subr.mxu0 %v329
    %1620 = vmatpush1.msra.mxu0 %v328
    %1621 = vmatprep.subr.mxu0 %v333
    %1622 = vmatpush1.msra.mxu0 %v332
    %1623 = vmatprep.subr.mxu0 %v337
    %1624 = vmatpush1.msra.mxu0 %v336
    %1625 = vmatprep.subr.mxu0 0.0
    %1626 = vmatpush1.msra.mxu0 0.0
    %1627 = vmatprep.subr.mxu0 0.0
    %1628 = vmatpush1.msra.mxu0 0.0
    %1629 = vmatprep.subr.mxu0 0.0
    %1630 = vmatpush1.msra.mxu0 0.0
    %1631 = vmatprep.subr.mxu0 0.0
    %1632 = vmatpush1.msra.mxu0 0.0
    %1633 = vmatprep.subr.mxu0 0.0
    %1634 = vmatpush1.msra.mxu0 0.0
    %1635 = vmatprep.subr.mxu0 0.0
    %1636 = vmatpush1.msra.mxu0 0.0
    %1637 = vmatprep.subr.mxu0 0.0
    %1638 = vmatpush1.msra.mxu0 0.0
    %1639 = vmatprep.subr.mxu0 0.0
    %1640 = vmatpush1.msra.mxu0 0.0
    %1641 = vmatprep.subr.mxu0 0.0
    %1642 = vmatpush1.msra.mxu0 0.0
    %1643 = vmatprep.subr.mxu0 0.0
    %1644 = vmatpush1.msra.mxu0 0.0
    %1645 = vmatprep.subr.mxu0 0.0
    %1646 = vmatpush1.msra.mxu0 0.0
    %1647 = vmatprep.subr.mxu0 0.0
    %1648 = vmatpush1.msra.mxu0 0.0
    %1649 = vmatprep.subr.mxu0 0.0
    %1650 = vmatpush1.msra.mxu0 0.0
    %1651 = vmatprep.subr.mxu0 0.0
    %1652 = vmatpush1.msra.mxu0 0.0
    %1653 = vmatprep.subr.mxu0 0.0
    %1654 = vmatpush1.msra.mxu0 0.0
    %1655 = vmatprep.subr.mxu0 0.0
    %1656 = vmatpush1.msra.mxu0 0.0
    %1657 = vmatprep.mubr.f32.mxu0 0.0
    %1658 = vmatmul.mubr.f32.gmra.mrb[0].mxu0 %v1592
    %v1659 = vpop.f32.mrb[0].mxu0
    %v1660 = vadd.f32 0.0, %v1659
    %v1661 = vpop.f32.mrb[0].mxu0
    %v1662 = vadd.f32 0.0, %v1661
    %1663 = vdwg.mxu0
    %1664 = vmatprep.subr.mxu0 %v279
    %1665 = vmatpush1.msra.mxu0 %v278
    %1666 = vmatprep.subr.mxu0 %v283
    %1667 = vmatpush1.msra.mxu0 %v282
    %1668 = vmatprep.subr.mxu0 %v287
    %1669 = vmatpush1.msra.mxu0 %v286
    %1670 = vmatprep.subr.mxu0 %v291
    %1671 = vmatpush1.msra.mxu0 %v290
    %1672 = vmatprep.subr.mxu0 %v295
    %1673 = vmatpush1.msra.mxu0 %v294
    %1674 = vmatprep.subr.mxu0 %v299
    %1675 = vmatpush1.msra.mxu0 %v298
    %1676 = vmatprep.subr.mxu0 %v303
    %1677 = vmatpush1.msra.mxu0 %v302
    %1678 = vmatprep.subr.mxu0 %v307
    %1679 = vmatpush1.msra.mxu0 %v306
    %1680 = vmatprep.subr.mxu0 %v311
    %1681 = vmatpush1.msra.mxu0 %v310
    %1682 = vmatprep.subr.mxu0 %v315
    %1683 = vmatpush1.msra.mxu0 %v314
    %1684 = vmatprep.subr.mxu0 %v319
    %1685 = vmatpush1.msra.mxu0 %v318
    %1686 = vmatprep.subr.mxu0 %v323
    %1687 = vmatpush1.msra.mxu0 %v322
    %1688 = vmatprep.subr.mxu0 %v327
    %1689 = vmatpush1.msra.mxu0 %v326
    %1690 = vmatprep.subr.mxu0 %v331
    %1691 = vmatpush1.msra.mxu0 %v330
    %1692 = vmatprep.subr.mxu0 %v335
    %1693 = vmatpush1.msra.mxu0 %v334
    %1694 = vmatprep.subr.mxu0 %v339
    %1695 = vmatpush1.msra.mxu0 %v338
    %1696 = vmatprep.subr.mxu0 0.0
    %1697 = vmatpush1.msra.mxu0 0.0
    %1698 = vmatprep.subr.mxu0 0.0
    %1699 = vmatpush1.msra.mxu0 0.0
    %1700 = vmatprep.subr.mxu0 0.0
    %1701 = vmatpush1.msra.mxu0 0.0
    %1702 = vmatprep.subr.mxu0 0.0
    %1703 = vmatpush1.msra.mxu0 0.0
    %1704 = vmatprep.subr.mxu0 0.0
    %1705 = vmatpush1.msra.mxu0 0.0
    %1706 = vmatprep.subr.mxu0 0.0
    %1707 = vmatpush1.msra.mxu0 0.0
    %1708 = vmatprep.subr.mxu0 0.0
    %1709 = vmatpush1.msra.mxu0 0.0
    %1710 = vmatprep.subr.mxu0 0.0
    %1711 = vmatpush1.msra.mxu0 0.0
    %1712 = vmatprep.subr.mxu0 0.0
    %1713 = vmatpush1.msra.mxu0 0.0
    %1714 = vmatprep.subr.mxu0 0.0
    %1715 = vmatpush1.msra.mxu0 0.0
    %1716 = vmatprep.subr.mxu0 0.0
    %1717 = vmatpush1.msra.mxu0 0.0
    %1718 = vmatprep.subr.mxu0 0.0
    %1719 = vmatpush1.msra.mxu0 0.0
    %1720 = vmatprep.subr.mxu0 0.0
    %1721 = vmatpush1.msra.mxu0 0.0
    %1722 = vmatprep.subr.mxu0 0.0
    %1723 = vmatpush1.msra.mxu0 0.0
    %1724 = vmatprep.subr.mxu0 0.0
    %1725 = vmatpush1.msra.mxu0 0.0
    %1726 = vmatprep.subr.mxu0 0.0
    %1727 = vmatpush1.msra.mxu0 0.0
    %1728 = vmatprep.mubr.f32.mxu0 0.0
    %1729 = vmatmul.mubr.f32.gmra.mrb[0].mxu0 %v1592
    %v1730 = vpop.f32.mrb[0].mxu0
    %v1731 = vadd.f32 0.0, %v1730
    %v1732 = vpop.f32.mrb[0].mxu0
    %v1733 = vadd.f32 0.0, %v1732
    %1734 = vdwg.mxu0
    %v1739 = vrot.slane %v1660, 4
    %v1740 = vrot.slane %v1662, 4
    %v1741 = vrot.slane %v1731, 4
    %v1742 = vrot.slane %v1733, 4
    %v1747 = vadd.f32 %v183, %v1739
    %v1748 = vadd.f32 %v185, %v1740
    %v1749 = vadd.f32 %v272, %v1741
    %v1750 = vadd.f32 %v274, %v1742
    %v1751 = vxor.u32 %v1747, 2147483648
    %v1752 = vmul.f32 %v1751, 1.442695
    %v1753 = vpow.pop %v1752
    %v1754 = vadd.f32 %v1753, 1.0
    %v1755 = vrcp.pop %v1754
    %v1756 = vmul.f32 1.0, %v1755
    %v1757 = vxor.u32 %v1748, 2147483648
    %v1758 = vmul.f32 %v1757, 1.442695
    %v1759 = vpow.pop %v1758
    %v1760 = vadd.f32 %v1759, 1.0
    %v1761 = vrcp.pop %v1760
    %v1762 = vmul.f32 1.0, %v1761
    %v1763 = vtanh.pop %v1749
    %v1764 = vxor.u32 %v1750, 2147483648
    %v1765 = vmul.f32 %v1764, 1.442695
    %v1766 = vpow.pop %v1765
    %v1767 = vadd.f32 %v1766, 1.0
    %v1768 = vrcp.pop %v1767
    %v1769 = vmul.f32 1.0, %v1768
    %v1771 = vrot.slane %v1590, 4
    %v1773 = vmul.f32 %v1762, %v1771
    %v1774 = vmul.f32 %v1756, %v1763
    %v1775 = vadd.f32 %v1773, %v1774
    %v1776 = vtanh.pop %v1775
    %v1777 = vmul.f32 %v1769, %v1776
    %v1778 = vld [vmem:[%s4] sm:$0xff]
    %v1779 = vld [vmem:[%s4 + $0x8] sm:$0xff]
    %v1780 = vld [vmem:[%s4 + $0x10] sm:$0xff]
    %v1781 = vld [vmem:[%s4 + $0x18] sm:$0xff]
    %v1782 = vld [vmem:[%s4 + $0x20] sm:$0xff]
    %v1783 = vld [vmem:[%s4 + $0x28] sm:$0xff]
    %v1784 = vld [vmem:[%s4 + $0x30] sm:$0xff]
    %v1785 = vld [vmem:[%s4 + $0x38] sm:$0xff]
    %v1786 = vld [vmem:[%s4 + $0x40] sm:$0xff]
    %v1787 = vld [vmem:[%s4 + $0x48] sm:$0xff]
    %v1788 = vld [vmem:[%s4 + $0x50] sm:$0xff]
    %v1789 = vld [vmem:[%s4 + $0x58] sm:$0xff]
    %v1790 = vld [vmem:[%s4 + $0x60] sm:$0xff]
    %v1791 = vld [vmem:[%s4 + $0x68] sm:$0xff]
    %v1792 = vld [vmem:[%s4 + $0x70] sm:$0xff]
    %v1793 = vld [vmem:[%s4 + $0x78] sm:$0xff]
    %v1794 = vld [vmem:[%s5] sm:$0x1]
    %v1796 = vlaneseq
    %v1797 = vshrl.u32 %v1796, 7
    %v1798 = vsub.s32 0, %v1797
    %v1799 = vrot.slane %v1794, %v1798
    %v1802 = vrot.slane %v1777, 4
    %1804 = vmatprep.subr.mxu0 0.0
    %1805 = vmatpush1.msra.mxu0 %v1778
    %1806 = vmatprep.subr.mxu0 0.0
    %1807 = vmatpush1.msra.mxu0 %v1779
    %1808 = vmatprep.subr.mxu0 0.0
    %1809 = vmatpush1.msra.mxu0 %v1780
    %1810 = vmatprep.subr.mxu0 0.0
    %1811 = vmatpush1.msra.mxu0 %v1781
    %1812 = vmatprep.subr.mxu0 0.0
    %1813 = vmatpush1.msra.mxu0 %v1782
    %1814 = vmatprep.subr.mxu0 0.0
    %1815 = vmatpush1.msra.mxu0 %v1783
    %1816 = vmatprep.subr.mxu0 0.0
    %1817 = vmatpush1.msra.mxu0 %v1784
    %1818 = vmatprep.subr.mxu0 0.0
    %1819 = vmatpush1.msra.mxu0 %v1785
    %1820 = vmatprep.subr.mxu0 0.0
    %1821 = vmatpush1.msra.mxu0 %v1786
    %1822 = vmatprep.subr.mxu0 0.0
    %1823 = vmatpush1.msra.mxu0 %v1787
    %1824 = vmatprep.subr.mxu0 0.0
    %1825 = vmatpush1.msra.mxu0 %v1788
    %1826 = vmatprep.subr.mxu0 0.0
    %1827 = vmatpush1.msra.mxu0 %v1789
    %1828 = vmatprep.subr.mxu0 0.0
    %1829 = vmatpush1.msra.mxu0 %v1790
    %1830 = vmatprep.subr.mxu0 0.0
    %1831 = vmatpush1.msra.mxu0 %v1791
    %1832 = vmatprep.subr.mxu0 0.0
    %1833 = vmatpush1.msra.mxu0 %v1792
    %1834 = vmatprep.subr.mxu0 0.0
    %1835 = vmatpush1.msra.mxu0 %v1793
    %1836 = vmatprep.subr.mxu0 0.0
    %1837 = vmatpush1.msra.mxu0 0.0
    %1838 = vmatprep.subr.mxu0 0.0
    %1839 = vmatpush1.msra.mxu0 0.0
    %1840 = vmatprep.subr.mxu0 0.0
    %1841 = vmatpush1.msra.mxu0 0.0
    %1842 = vmatprep.subr.mxu0 0.0
    %1843 = vmatpush1.msra.mxu0 0.0
    %1844 = vmatprep.subr.mxu0 0.0
    %1845 = vmatpush1.msra.mxu0 0.0
    %1846 = vmatprep.subr.mxu0 0.0
    %1847 = vmatpush1.msra.mxu0 0.0
    %1848 = vmatprep.subr.mxu0 0.0
    %1849 = vmatpush1.msra.mxu0 0.0
    %1850 = vmatprep.subr.mxu0 0.0
    %1851 = vmatpush1.msra.mxu0 0.0
    %1852 = vmatprep.subr.mxu0 0.0
    %1853 = vmatpush1.msra.mxu0 0.0
    %1854 = vmatprep.subr.mxu0 0.0
    %1855 = vmatpush1.msra.mxu0 0.0
    %1856 = vmatprep.subr.mxu0 0.0
    %1857 = vmatpush1.msra.mxu0 0.0
    %1858 = vmatprep.subr.mxu0 0.0
    %1859 = vmatpush1.msra.mxu0 0.0
    %1860 = vmatprep.subr.mxu0 0.0
    %1861 = vmatpush1.msra.mxu0 0.0
    %1862 = vmatprep.subr.mxu0 0.0
    %1863 = vmatpush1.msra.mxu0 0.0
    %1864 = vmatprep.subr.mxu0 0.0
    %1865 = vmatpush1.msra.mxu0 0.0
    %1866 = vmatprep.subr.mxu0 0.0
    %1867 = vmatpush1.msra.mxu0 0.0
    %1868 = vmatprep.mubr.f32.mxu0 0.0
    %1869 = vmatmul.mubr.f32.gmra.mrb[0].mxu0 %v1802
    %v1870 = vpop.f32.mrb[0].mxu0
    %v1871 = vadd.f32 %v1799, %v1870
    %v1872 = vpop.f32.mrb[0].mxu0
    %1873 = vdwg.mxu0
    %v1874 = vmax.f32 %v1871, 0.0
    %v1875 = vld [vmem:[%s6] sm:$0xff]
    %v1876 = vld [vmem:[%s6 + $0x8] sm:$0xff]
    %v1877 = vld [vmem:[%s6 + $0x10] sm:$0xff]
    %v1878 = vld [vmem:[%s6 + $0x18] sm:$0xff]
    %v1879 = vld [vmem:[%s6 + $0x20] sm:$0xff]
    %v1880 = vld [vmem:[%s6 + $0x28] sm:$0xff]
    %v1881 = vld [vmem:[%s6 + $0x30] sm:$0xff]
    %v1882 = vld [vmem:[%s6 + $0x38] sm:$0xff]
    %v1883 = vld [vmem:[%s6 + $0x40] sm:$0xff]
    %v1884 = vld [vmem:[%s6 + $0x48] sm:$0xff]
    %v1885 = vld [vmem:[%s6 + $0x50] sm:$0xff]
    %v1886 = vld [vmem:[%s6 + $0x58] sm:$0xff]
    %v1887 = vld [vmem:[%s6 + $0x60] sm:$0xff]
    %v1888 = vld [vmem:[%s6 + $0x68] sm:$0xff]
    %v1889 = vld [vmem:[%s6 + $0x70] sm:$0xff]
    %v1890 = vld [vmem:[%s6 + $0x78] sm:$0xff]
    %v1891 = vld [vmem:[%s7] sm:$0x1]
    %v1893 = vlaneseq
    %v1894 = vshrl.u32 %v1893, 7
    %v1895 = vsub.s32 0, %v1894
    %v1896 = vrot.slane %v1891, %v1895
    %1898 = vmatprep.subr.mxu0 0.0
    %1899 = vmatpush1.msra.mxu0 %v1875
    %1900 = vmatprep.subr.mxu0 0.0
    %1901 = vmatpush1.msra.mxu0 %v1876
    %1902 = vmatprep.subr.mxu0 0.0
    %1903 = vmatpush1.msra.mxu0 %v1877
    %1904 = vmatprep.subr.mxu0 0.0
    %1905 = vmatpush1.msra.mxu0 %v1878
    %1906 = vmatprep.subr.mxu0 0.0
    %1907 = vmatpush1.msra.mxu0 %v1879
    %1908 = vmatprep.subr.mxu0 0.0
    %1909 = vmatpush1.msra.mxu0 %v1880
    %1910 = vmatprep.subr.mxu0 0.0
    %1911 = vmatpush1.msra.mxu0 %v1881
    %1912 = vmatprep.subr.mxu0 0.0
    %1913 = vmatpush1.msra.mxu0 %v1882
    %1914 = vmatprep.subr.mxu0 0.0
    %1915 = vmatpush1.msra.mxu0 %v1883
    %1916 = vmatprep.subr.mxu0 0.0
    %1917 = vmatpush1.msra.mxu0 %v1884
    %1918 = vmatprep.subr.mxu0 0.0
    %1919 = vmatpush1.msra.mxu0 %v1885
    %1920 = vmatprep.subr.mxu0 0.0
    %1921 = vmatpush1.msra.mxu0 %v1886
    %1922 = vmatprep.subr.mxu0 0.0
    %1923 = vmatpush1.msra.mxu0 %v1887
    %1924 = vmatprep.subr.mxu0 0.0
    %1925 = vmatpush1.msra.mxu0 %v1888
    %1926 = vmatprep.subr.mxu0 0.0
    %1927 = vmatpush1.msra.mxu0 %v1889
    %1928 = vmatprep.subr.mxu0 0.0
    %1929 = vmatpush1.msra.mxu0 %v1890
    %1930 = vmatprep.subr.mxu0 0.0
    %1931 = vmatpush1.msra.mxu0 0.0
    %1932 = vmatprep.subr.mxu0 0.0
    %1933 = vmatpush1.msra.mxu0 0.0
    %1934 = vmatprep.subr.mxu0 0.0
    %1935 = vmatpush1.msra.mxu0 0.0
    %1936 = vmatprep.subr.mxu0 0.0
    %1937 = vmatpush1.msra.mxu0 0.0
    %1938 = vmatprep.subr.mxu0 0.0
    %1939 = vmatpush1.msra.mxu0 0.0
    %1940 = vmatprep.subr.mxu0 0.0
    %1941 = vmatpush1.msra.mxu0 0.0
    %1942 = vmatprep.subr.mxu0 0.0
    %1943 = vmatpush1.msra.mxu0 0.0
    %1944 = vmatprep.subr.mxu0 0.0
    %1945 = vmatpush1.msra.mxu0 0.0
    %1946 = vmatprep.subr.mxu0 0.0
    %1947 = vmatpush1.msra.mxu0 0.0
    %1948 = vmatprep.subr.mxu0 0.0
    %1949 = vmatpush1.msra.mxu0 0.0
    %1950 = vmatprep.subr.mxu0 0.0
    %1951 = vmatpush1.msra.mxu0 0.0
    %1952 = vmatprep.subr.mxu0 0.0
    %1953 = vmatpush1.msra.mxu0 0.0
    %1954 = vmatprep.subr.mxu0 0.0
    %1955 = vmatpush1.msra.mxu0 0.0
    %1956 = vmatprep.subr.mxu0 0.0
    %1957 = vmatpush1.msra.mxu0 0.0
    %1958 = vmatprep.subr.mxu0 0.0
    %1959 = vmatpush1.msra.mxu0 0.0
    %1960 = vmatprep.subr.mxu0 0.0
    %1961 = vmatpush1.msra.mxu0 0.0
    %1962 = vmatprep.mubr.f32.mxu0 0.0
    %1963 = vmatmul.mubr.f32.gmra.mrb[0].mxu0 %v1874
    %v1964 = vpop.f32.mrb[0].mxu0
    %v1965 = vadd.f32 %v1896, %v1964
    %v1966 = vpop.f32.mrb[0].mxu0
    %1967 = vdwg.mxu0
    %v1968 = vmax.f32 %v1965, 0.0
    %v1970 = vrot.slane %v1968, 2
    %v1972 = vsub.f32 %v1968, %v1970
    %v1973 = vand.u32 2147483647, %v1972
    %v1974 = vld [vmem:[%s8] sm:$0xff]
    %v1975 = vld [vmem:[%s8 + $0x8] sm:$0xff]
    %v1976 = vld [vmem:[%s8 + $0x10] sm:$0xff]
    %v1977 = vld [vmem:[%s8 + $0x18] sm:$0xff]
    %v1978 = vld [vmem:[%s8 + $0x20] sm:$0xff]
    %v1979 = vld [vmem:[%s8 + $0x28] sm:$0xff]
    %v1980 = vld [vmem:[%s8 + $0x30] sm:$0xff]
    %v1981 = vld [vmem:[%s8 + $0x38] sm:$0xff]
    %v1982 = vld [vmem:[#allocation2] sm:$0x1]
    %v1984 = vlaneseq
    %v1985 = vshrl.u32 %v1984, 7
    %v1986 = vsub.s32 0, %v1985
    %v1987 = vrot.slane %v1982, %v1986
    %vm1989 = vcmask 523264
    %v1991 = vsel %vm1989, %v1973, 0
    %1993 = vmatprep.subr.mxu0 0.0
    %1994 = vmatpush1.msra.mxu0 %v1974
    %1995 = vmatprep.subr.mxu0 0.0
    %1996 = vmatpush1.msra.mxu0 %v1975
    %1997 = vmatprep.subr.mxu0 0.0
    %1998 = vmatpush1.msra.mxu0 %v1976
    %1999 = vmatprep.subr.mxu0 0.0
    %2000 = vmatpush1.msra.mxu0 %v1977
    %2001 = vmatprep.subr.mxu0 0.0
    %2002 = vmatpush1.msra.mxu0 %v1978
    %2003 = vmatprep.subr.mxu0 0.0
    %2004 = vmatpush1.msra.mxu0 %v1979
    %2005 = vmatprep.subr.mxu0 0.0
    %2006 = vmatpush1.msra.mxu0 %v1980
    %2007 = vmatprep.subr.mxu0 0.0
    %2008 = vmatpush1.msra.mxu0 %v1981
    %2009 = vmatprep.subr.mxu0 0.0
    %2010 = vmatpush1.msra.mxu0 0.0
    %2011 = vmatprep.subr.mxu0 0.0
    %2012 = vmatpush1.msra.mxu0 0.0
    %2013 = vmatprep.subr.mxu0 0.0
    %2014 = vmatpush1.msra.mxu0 0.0
    %2015 = vmatprep.subr.mxu0 0.0
    %2016 = vmatpush1.msra.mxu0 0.0
    %2017 = vmatprep.subr.mxu0 0.0
    %2018 = vmatpush1.msra.mxu0 0.0
    %2019 = vmatprep.subr.mxu0 0.0
    %2020 = vmatpush1.msra.mxu0 0.0
    %2021 = vmatprep.subr.mxu0 0.0
    %2022 = vmatpush1.msra.mxu0 0.0
    %2023 = vmatprep.subr.mxu0 0.0
    %2024 = vmatpush1.msra.mxu0 0.0
    %2025 = vmatprep.subr.mxu0 0.0
    %2026 = vmatpush1.msra.mxu0 0.0
    %2027 = vmatprep.subr.mxu0 0.0
    %2028 = vmatpush1.msra.mxu0 0.0
    %2029 = vmatprep.subr.mxu0 0.0
    %2030 = vmatpush1.msra.mxu0 0.0
    %2031 = vmatprep.subr.mxu0 0.0
    %2032 = vmatpush1.msra.mxu0 0.0
    %2033 = vmatprep.subr.mxu0 0.0
    %2034 = vmatpush1.msra.mxu0 0.0
    %2035 = vmatprep.subr.mxu0 0.0
    %2036 = vmatpush1.msra.mxu0 0.0
    %2037 = vmatprep.subr.mxu0 0.0
    %2038 = vmatpush1.msra.mxu0 0.0
    %2039 = vmatprep.subr.mxu0 0.0
    %2040 = vmatpush1.msra.mxu0 0.0
    %2041 = vmatprep.subr.mxu0 0.0
    %2042 = vmatpush1.msra.mxu0 0.0
    %2043 = vmatprep.subr.mxu0 0.0
    %2044 = vmatpush1.msra.mxu0 0.0
    %2045 = vmatprep.subr.mxu0 0.0
    %2046 = vmatpush1.msra.mxu0 0.0
    %2047 = vmatprep.subr.mxu0 0.0
    %2048 = vmatpush1.msra.mxu0 0.0
    %2049 = vmatprep.subr.mxu0 0.0
    %2050 = vmatpush1.msra.mxu0 0.0
    %2051 = vmatprep.subr.mxu0 0.0
    %2052 = vmatpush1.msra.mxu0 0.0
    %2053 = vmatprep.subr.mxu0 0.0
    %2054 = vmatpush1.msra.mxu0 0.0
    %2055 = vmatprep.subr.mxu0 0.0
    %2056 = vmatpush1.msra.mxu0 0.0
    %2057 = vmatprep.mubr.f32.mxu0 0.0
    %2058 = vmatmul.mubr.f32.gmra.mrb[0].mxu0 %v1991
    %v2059 = vpop.f32.mrb[0].mxu0
    %v2060 = vadd.f32 %v1987, %v2059
    %v2061 = vpop.f32.mrb[0].mxu0
    %2062 = vdwg.mxu0
    %v2063 = vxor.u32 %v2060, 2147483648
    %v2064 = vmul.f32 %v2063, 1.442695
    %v2065 = vpow.pop %v2064
    %v2066 = vadd.f32 %v2065, 1.0
    %v2067 = vrcp.pop %v2066
    %v2068 = vmul.f32 1.0, %v2067
    %vm2069 = vcmask 1024
    %2070 = vst.msk [vmem:[%s10] sm:$0x3] %vm2069, %v2068
    // Predicated region
    $region46: #{siamese_lstm_forward.1} parent=1 // pred_check
      _
    $region47: #{siamese_lstm_forward.1} parent=1 // pred_check_branch
      %2072 = sbr.rel (0) target = $region49
    $region48: #{siamese_lstm_forward.1} parent=1 // pred_region
      _
    $region49: #{siamese_lstm_forward.1} parent=1 // pred_fallthru
      _
    // Predicated region
    $region50: #{siamese_lstm_forward.1} parent=1 // pred_check
      _
    $region51: #{siamese_lstm_forward.1} parent=1 // pred_check_branch
      %2074 = sbr.rel (0) target = $region53
    $region52: #{siamese_lstm_forward.1} parent=1 // pred_region
      _
    $region53: #{siamese_lstm_forward.1} parent=1 // pred_fallthru
      _
    %2075 = vsyncpa [#allocation4], 1

</llo_original>
